<compile_context>
chip_gen: v7x
topology: tpu7x:2x2x1
jax: 0.10.0
libtpu: 0.0.40
codegen_flags: <defaults>
</compile_context>

<pallas_src>
import jax
import jax.numpy as jnp
from jax.experimental import pallas as pl
from jax.experimental.pallas import tpu as pltpu


# --------------------------------------------------------------------------- #
# Kernels
# --------------------------------------------------------------------------- #
def _make_fast_kernel(A: int, BA: int, th: int, W: int):
    """Fast kernel: (A, BA, th*W) -> (A, th, W*BA), lane-dense loads & stores."""

    def kernel(x_ref, o_ref):
        # x_ref: (A, BA, th*W)  -- th*W elements on the 128-lane axis (full-lane loads)
        # o_ref: (A, th, W*BA)  -- W*BA elements on the 128-lane axis (full-lane stores)
        #
        # Single whole-block relayout: swap the minor two dims (one batched XLU
        # transpose, no per-anchor loop), then fold (h*w, c) -> (h, w*c).
        # Row-major element order is preserved, so the wrapper's final reshape
        # back to (N, A, H, W, BA) is a free view.
        y = jnp.swapaxes(x_ref[...], 1, 2)          # (A, th*W, BA)
        o_ref[...] = y.reshape(A, th, W * BA)       # (A, th, W*BA)

    return kernel


def _fallback_permute_kernel(x_ref, o_ref):
    # Previously validated, reshape-free formulation: (BA, H, W) -> (H, W, BA).
    # Only used if the running Mosaic build cannot lower the fast path's
    # minor-dim fold.  Kept byte-identical to the proven kernel on purpose:
    # its job is guaranteed lowering, not speed (stores are lane-sparse).
    o_ref[...] = jnp.transpose(x_ref[...], (1, 2, 0))


# --------------------------------------------------------------------------- #
# Tiling helpers
# --------------------------------------------------------------------------- #
def _pick_row_tile(H: int, W: int, A: int, BA: int, itemsize: int,
                   target_block_bytes: int = 2 * 1024 * 1024) -> int:
    """Pick an H-tile `th` so that blocks are (8,128)-aligned and small.

    Constraints:
      * th divides H
      * th % 8 == 0            (output block second-minor dim)
      * (th*W) % 128 == 0      (input block lane dim)
      * A*BA*th*W*itemsize <= target_block_bytes   (VMEM headroom, v7x-safe)
    Falls back to th == H (full feature map; always a legal block).
    """
    cands = [th for th in range(8, H + 1, 8)
             if H % th == 0 and (th * W) % 128 == 0]
    if not cands:
        return H
    def nbytes(th):
        return A * BA * th * W * itemsize
    fitting = [th for th in cands if nbytes(th) <= target_block_bytes]
    if not fitting:
        return min(cands)
    # Prefer >=2 steps along H so a 2-TensorCore chip (v7x) has work to split
    # and the pipeline has enough stages to hide HBM traffic.
    multi = [th for th in fitting if H // th >= 2]
    return max(multi) if multi else max(fitting)


# --------------------------------------------------------------------------- #
# Module
# --------------------------------------------------------------------------- #
class YoloLayer:
    """JAX/Pallas port of model/yolov3.py::YoloLayer (forward only)."""

    def __init__(self, layer_info: dict, in_width: int, in_height: int, is_train: bool):
        self.n_classes = int(layer_info["classes"])
        self.ignore_thresh = float(layer_info["ignore_thresh"])
        self.box_attr = self.n_classes + 5
        mask_idxes = [int(v) for v in layer_info["mask"].split(",")]
        anchor_all = [int(v) for v in layer_info["anchors"].split(",")]
        anchor_all = [(anchor_all[i], anchor_all[i + 1]) for i in range(0, len(anchor_all), 2)]
        # deterministic "parameter" (anchors) built in-script, no checkpoint load
        self.anchor = jnp.array([anchor_all[i] for i in mask_idxes], dtype=jnp.int32)
        self.in_width = in_width
        self.in_height = in_height
        self.training = is_train
        self.stride = None
        self.lw = None
        self.lh = None
        self._fast_ok = None  # None: unprobed, True/False: probe result

    # ---------------- fast path: lane-dense loads + stores, H-tiled grid ----
    def _forward_fast(self, x, N, A, H, W):
        BA = self.box_attr
        itemsize = x.dtype.itemsize
        th = _pick_row_tile(H, W, A, BA, itemsize)

        # free row-major view: fold (H, W) -> H*W so the input block is lane-dense
        x3 = x.reshape(N, A, BA, H * W)

        # VMEM budget derived from actual block bytes (in block == out block),
        # clamped to [32 MiB, 64 MiB] (v7x physical VMEM is 64 MiB).
        block_bytes = A * BA * th * W * itemsize
        vmem_limit = int(min(64 * 1024 * 1024, max(32 * 1024 * 1024, 8 * block_bytes)))

        out2 = pl.pallas_call(
            _make_fast_kernel(A, BA, th, W),
            out_shape=jax.ShapeDtypeStruct((N, A, H, W * BA), x.dtype),
            grid=(N, H // th),
            in_specs=[
                pl.BlockSpec((None, A, BA, th * W), lambda b, h: (b, 0, 0, h)),
            ],
            out_specs=pl.BlockSpec((None, A, th, W * BA), lambda b, h: (b, 0, h, 0)),
            compiler_params=pltpu.CompilerParams(
                dimension_semantics=("parallel", "parallel"),
                vmem_limit_bytes=vmem_limit,
            ),
            cost_estimate=pl.CostEstimate(
                flops=0,
                transcendentals=0,
                bytes_accessed=2 * x.size * itemsize,
            ),
        )(x3)
        # free row-major view back to the PyTorch output layout
        return out2.reshape(N, A, H, W, BA)

    # ---------------- fallback path: previously validated formulation -------
    def _forward_fallback(self, x, N, A, H, W):
        BA = self.box_attr
        x5 = x.reshape(N, A, BA, H, W)
        return pl.pallas_call(
            _fallback_permute_kernel,
            out_shape=jax.ShapeDtypeStruct((N, A, H, W, BA), x.dtype),
            grid=(N, A),
            in_specs=[
                pl.BlockSpec((None, None, BA, H, W), lambda b, a: (b, a, 0, 0, 0)),
            ],
            out_specs=pl.BlockSpec((None, None, H, W, BA), lambda b, a: (b, a, 0, 0, 0)),
            compiler_params=pltpu.CompilerParams(
                dimension_semantics=("parallel", "parallel"),
            ),
        )(x5)

    def __call__(self, x):
        N, C, H, W = x.shape
        A = int(self.anchor.shape[0])
        assert C == A * self.box_attr, "channel dim must equal num_anchors * (classes + 5)"

        # bookkeeping mirroring the PyTorch module (eager-mode state; under
        # jax.jit select a path explicitly and drop these stateful writes)
        self.lw = W
        self.lh = H
        self.stride = jnp.array(
            [self.in_width // W, self.in_height // H], dtype=jnp.int32
        )

        if self._fast_ok is not False:
            try:
                out = self._forward_fast(x, N, A, H, W)
                self._fast_ok = True
                return out
            except Exception:
                if self._fast_ok:
                    # fast path already validated on this build -> this is a
                    # transient/runtime error, do not silently degrade.
                    raise
                # Mosaic on this build could not lower the minor-dim fold;
                # permanently route to the reshape-free fallback.
                self._fast_ok = False
        return self._forward_fallback(x, N, A, H, W)


# --------------------------------------------------------------------------- #
# Self-test
# --------------------------------------------------------------------------- #
if __name__ == "__main__":
    # Small, self-consistent config:
    #   3 classes -> box_attr = 8, 3 anchors via mask -> C = 24
    layer_info = {
        "classes": "3",
        "ignore_thresh": "0.7",
        "mask": "0,1,2",
        "anchors": "10,13,16,30,33,23,30,61,62,45,59,119",
    }
    in_width, in_height = 32, 32  # network input size (stride = 32 // 16 = 2)

    key = jax.random.PRNGKey(0)
    N, A, box_attr, H, W = 2, 3, 8, 16, 16
    x = jax.random.normal(key, (N, A * box_attr, H, W), dtype=jnp.float32)

    layer = YoloLayer(layer_info, in_width, in_height, is_train=True)
    out = layer(x)
    out = jax.block_until_ready(out)

    # pure-JAX reference of the PyTorch forward
    ref = jnp.transpose(x.reshape(N, A, box_attr, H, W), (0, 1, 3, 4, 2))

    assert out.shape == (N, A, H, W, box_attr), out.shape
    assert out.dtype == x.dtype
    assert jnp.allclose(out, ref), "mismatch vs reference permute"

    # NOTE: this micro-size (49 KB) run only checks correctness/lowering;
    # real-layer performance should be judged against the HBM roofline with
    # xprof min-of-runs, not this script's wall clock.
    print("KERNEL_OK")
</pallas_src>

<mosaic_0001>
module attributes {stable_mosaic.version = 11 : i64} {
  func.func @kernel(%arg0: i32, %arg1: i32, %arg2: memref<1x3x8x128xf32, #tpu.memory_space<vmem>>, %arg3: memref<1x3x8x128xf32, #tpu.memory_space<vmem>>) attributes {dimension_semantics = [#tpu.dimension_semantics<parallel>, #tpu.dimension_semantics<parallel>], iteration_bounds = array<i64: 2, 2>, scalar_prefetch = 0 : i64, scratch_operands = 0 : i64, tpu.core_type = #tpu.core_type<tc>, window_params = [{transform_indices = @transform_0, window_bounds = array<i64: 1, 3, 8, 128>}, {transform_indices = @transform_1, window_bounds = array<i64: 1, 3, 8, 128>}]} {
    %c0 = arith.constant 0 : index
    %c0_0 = arith.constant 0 : index
    %c0_1 = arith.constant 0 : index
    %c0_2 = arith.constant 0 : index
    %0 = vector.load %arg2[%c0, %c0_0, %c0_1, %c0_2] : memref<1x3x8x128xf32, #tpu.memory_space<vmem>>, vector<1x3x8x128xf32>
    %1 = vector.shape_cast %0 : vector<1x3x8x128xf32> to vector<3x8x128xf32>
    %2 = tpu.transpose %1, [0, 2, 1] : vector<3x8x128xf32> -> vector<3x128x8xf32>
    %3 = vector.shape_cast %2 : vector<3x128x8xf32> to vector<3x8x128xf32>
    %c0_3 = arith.constant 0 : index
    %c0_4 = arith.constant 0 : index
    %c0_5 = arith.constant 0 : index
    %c0_6 = arith.constant 0 : index
    %4 = vector.load %arg3[%c0_3, %c0_4, %c0_5, %c0_6] : memref<1x3x8x128xf32, #tpu.memory_space<vmem>>, vector<1x3x8x128xf32>
    %5 = vector.shape_cast %4 : vector<1x3x8x128xf32> to vector<3x8x128xf32>
    %6 = vector.shape_cast %3 : vector<3x8x128xf32> to vector<1x3x8x128xf32>
    tpu.vector_store %arg3[%c0_3, %c0_4, %c0_5, %c0_6], %6 {strides = array<i32>} : memref<1x3x8x128xf32, #tpu.memory_space<vmem>>, vector<1x3x8x128xf32>,
    return
  }
  func.func @transform_0(%arg0: i32, %arg1: i32) -> (i32, i32, i32, i32) {
    %c0_i32 = arith.constant 0 : i32
    %c0_i32_0 = arith.constant 0 : i32
    %c0_i32_1 = arith.constant 0 : i32
    return %arg0, %c0_i32, %c0_i32_0, %arg1 : i32, i32, i32, i32
  }
  func.func @transform_1(%arg0: i32, %arg1: i32) -> (i32, i32, i32, i32) {
    %c0_i32 = arith.constant 0 : i32
    %c0_i32_0 = arith.constant 0 : i32
    %c0_i32_1 = arith.constant 0 : i32
    return %arg0, %c0_i32, %arg1, %c0_i32_0 : i32, i32, i32, i32
  }
}

module attributes {stable_mosaic.version = 11 : i64} {
  func.func @_fallback_permute_kernel(%arg0: i32, %arg1: i32, %arg2: memref<1x1x8x16x16xf32, #tpu.memory_space<vmem>>, %arg3: memref<1x1x16x16x8xf32, #tpu.memory_space<vmem>>) attributes {dimension_semantics = [#tpu.dimension_semantics<parallel>, #tpu.dimension_semantics<parallel>], iteration_bounds = array<i64: 2, 3>, scalar_prefetch = 0 : i64, scratch_operands = 0 : i64, tpu.core_type = #tpu.core_type<tc>, window_params = [{transform_indices = @transform_0, window_bounds = array<i64: 1, 1, 8, 16, 16>}, {transform_indices = @transform_1, window_bounds = array<i64: 1, 1, 16, 16, 8>}]} {
    %c0 = arith.constant 0 : index
    %c0_0 = arith.constant 0 : index
    %c0_1 = arith.constant 0 : index
    %c0_2 = arith.constant 0 : index
    %c0_3 = arith.constant 0 : index
    %0 = vector.load %arg2[%c0, %c0_0, %c0_1, %c0_2, %c0_3] : memref<1x1x8x16x16xf32, #tpu.memory_space<vmem>>, vector<1x1x8x16x16xf32>
    %1 = vector.shape_cast %0 : vector<1x1x8x16x16xf32> to vector<8x16x16xf32>
    %2 = tpu.transpose %1, [1, 2, 0] : vector<8x16x16xf32> -> vector<16x16x8xf32>
    %c0_4 = arith.constant 0 : index
    %c0_5 = arith.constant 0 : index
    %c0_6 = arith.constant 0 : index
    %c0_7 = arith.constant 0 : index
    %c0_8 = arith.constant 0 : index
    %3 = vector.load %arg3[%c0_4, %c0_5, %c0_6, %c0_7, %c0_8] : memref<1x1x16x16x8xf32, #tpu.memory_space<vmem>>, vector<1x1x16x16x8xf32>
    %4 = vector.shape_cast %3 : vector<1x1x16x16x8xf32> to vector<16x16x8xf32>
    %5 = vector.shape_cast %2 : vector<16x16x8xf32> to vector<1x1x16x16x8xf32>
    tpu.vector_store %arg3[%c0_4, %c0_5, %c0_6, %c0_7, %c0_8], %5 {strides = array<i32>} : memref<1x1x16x16x8xf32, #tpu.memory_space<vmem>>, vector<1x1x16x16x8xf32>,
    return
  }
  func.func @transform_0(%arg0: i32, %arg1: i32) -> (i32, i32, i32, i32, i32) {
    %c0_i32 = arith.constant 0 : i32
    %c0_i32_0 = arith.constant 0 : i32
    %c0_i32_1 = arith.constant 0 : i32
    %c0_i32_2 = arith.constant 0 : i32
    return %arg0, %arg1, %c0_i32, %c0_i32_0, %c0_i32_1 : i32, i32, i32, i32, i32
  }
  func.func @transform_1(%arg0: i32, %arg1: i32) -> (i32, i32, i32, i32, i32) {
    %c0_i32 = arith.constant 0 : i32
    %c0_i32_0 = arith.constant 0 : i32
    %c0_i32_1 = arith.constant 0 : i32
    %c0_i32_2 = arith.constant 0 : i32
    return %arg0, %arg1, %c0_i32, %c0_i32_0, %c0_i32_1 : i32, i32, i32, i32, i32
  }
}

</mosaic_0001>

<llo_original>
// kernel: tpu_custom_call.1
$region0: #{tpu_custom_call.1}
  #allocation0 [shape = 'u32[]', space=smem, size = 0x4, offset = 0x4, fixed_abs, tag = 'smem constant byte address 0x4 - core index']
  #allocation1 [shape = 'u32[144,128]{1,0:T(1,128)}', space=vmem, size = 0x12000, scoped, tag = 'internal scratch']
  %s0 = inlined_call_operand.hbm [shape: f32[2,3,8,16,16], index: 0, kind: input, shape index: {}]
  %s1 = inlined_call_operand.vmem [shape: f32[2,3,16,16,8], index: 1, kind: output, shape index: {}]
  %s2 = sld [smem:[#allocation0]]
  $region41: #{tpu_custom_call.1} parent=0
    _
  %s4 = ssub.s32 1, %s2
  %s5 = scalar_select 0, %s4, %s2
  $region1: #{tpu_custom_call.1} parent=0
    #allocation2 [shape = 'u8[131072]{0}', space=vmem, size = 0x20000, scoped, tag = 'input window, operand 0']
    #allocation3 [shape = 's32[2]{0}', space=sflag, size = 0x8, scoped, tag = 'scoped memory for tpu_custom_call.1']
    %6 = vsyncpa [#allocation3], 0
    %s7 = scalar_lea.sflag [#allocation3], 1
    %8 = vsyncpa %s7, 0
    loop: start=0, step=1, limit=8
    $region2: #{tpu_custom_call.1} parent=1 // loop_pre_header
      _
    $region3: #{tpu_custom_call.1} parent=1 // loop_header
      %s10 = sphi 0, %s14
      %p11 = scmp.ge.s32.totalorder %s10, 8
      %s17 = sphi 0, %s29
      %s18 = sphi 0, %s25
      %s19 = sphi 0, %s17
      %s20 = sphi 0, %s18
      %s21 = sphi 0, %s19
      %s22 = sphi 0, %s20
      %s34 = sphi 0, %s36
      %s37 = sphi 0, %s34
      %s38 = sphi 0, %s37
      %s54 = sphi 0, %s38
      %s62 = sphi 0, %s64
      %s65 = sphi 0, %s62
      %s66 = sphi 0, %s65
      %s82 = sphi 0, %s66
    $region4: #{tpu_custom_call.1} parent=1 // loop_header_branch
      %13 = sbr.rel (%p11) target = $region8
    $region5: #{tpu_custom_call.1} parent=1 // loop_body
      %s15 = ssub.s32 %s10, 1
      %s16 = ssub.s32 %s10, 2
      %s23 = sadd.s32 1, %s18
      %p24 = scmp.ge.s32.totalorder %s23, 3
      %s25 = scalar_select %p24, 0, %s23
      %s26 = sadd.s32 1, %s17
      %s27 = scalar_select %p24, %s26, %s17
      %p28 = scmp.ge.s32.totalorder %s27, 2
      %s29 = scalar_select %p28, 0, %s27
      %s30 = ssub.s32 %s17, %s29
      %s31 = ssub.s32 %s18, %s25
      %s32 = sor.u32 %s30, %s31
      %p33 = scmp.eq.s32.totalorder %s32, 0
      %s35 = sadd.s32 %s34, 1
      %s36 = scalar_select %p33, %s34, %s35
      %p39 = pneg %p33
      %p40 = scmp.eq.s32.totalorder %s10, 5
      %p41 = por %p39, %p40
      %p42 = scmp.ne.s32.totalorder %s34, %s37
      %p43 = scmp.eq.s32.totalorder %s10, 0
      %p44 = por %p42, %p43
      %p45 = scmp.ne.s32.totalorder %s34, %s37
      %p46 = scmp.eq.s32.totalorder %s15, 5
      %p47 = por %p45, %p46
      %p48 = scmp.ne.s32.totalorder %s37, %s38
      %p49 = scmp.eq.s32.totalorder %s15, 0
      %p50 = por %p48, %p49
      %p51 = scmp.ne.s32.totalorder %s37, %s38
      %p52 = scmp.eq.s32.totalorder %s16, 5
      %p53 = por %p51, %p52
      %p55 = scmp.ne.s32.totalorder %s38, %s54
      %p56 = scmp.eq.s32.totalorder %s16, 0
      %p57 = por %p55, %p56
      %s58 = ssub.s32 %s17, %s29
      %s59 = ssub.s32 %s18, %s25
      %s60 = sor.u32 %s58, %s59
      %p61 = scmp.eq.s32.totalorder %s60, 0
      %s63 = sadd.s32 %s62, 1
      %s64 = scalar_select %p61, %s62, %s63
      %p67 = pneg %p61
      %p68 = scmp.eq.s32.totalorder %s10, 5
      %p69 = por %p67, %p68
      %p70 = scmp.ne.s32.totalorder %s62, %s65
      %p71 = scmp.eq.s32.totalorder %s10, 0
      %p72 = por %p70, %p71
      %p73 = scmp.ne.s32.totalorder %s62, %s65
      %p74 = scmp.eq.s32.totalorder %s15, 5
      %p75 = por %p73, %p74
      %p76 = scmp.ne.s32.totalorder %s65, %s66
      %p77 = scmp.eq.s32.totalorder %s15, 0
      %p78 = por %p76, %p77
      %p79 = scmp.ne.s32.totalorder %s65, %s66
      %p80 = scmp.eq.s32.totalorder %s16, 5
      %p81 = por %p79, %p80
      %p83 = scmp.ne.s32.totalorder %s66, %s82
      %p84 = scmp.eq.s32.totalorder %s16, 0
      %p85 = por %p83, %p84
      %p86 = scmp.le.s32.totalorder 1, %s10
      %p87 = scmp.lt.s32.totalorder %s10, 7
      %p88 = pnand %p86, %p87
      %p89 = pneg %p88
      // Predicated region
      $region9: #{tpu_custom_call.1} parent=5 // pred_check
        _
      $region10: #{tpu_custom_call.1} parent=5 // pred_check_branch
        %91 = sbr.rel (%p88) target = $region12
      $region11: #{tpu_custom_call.1} parent=5 // pred_region
        %s92 = ssub.s32 %s10, 1
      $region12: #{tpu_custom_call.1} parent=5 // pred_fallthru
        _
      %p93 = scmp.lt.s32.totalorder %s10, 6
      // Predicated region
      $region13: #{tpu_custom_call.1} parent=5 // pred_check
        %p94 = pneg %p93
      $region14: #{tpu_custom_call.1} parent=5 // pred_check_branch
        %96 = sbr.rel (%p94) target = $region16
      $region15: #{tpu_custom_call.1} parent=5 // pred_region
        // Predicated region
        $region17: #{tpu_custom_call.1} parent=15 // pred_check
          %p97 = pneg %p44
        $region18: #{tpu_custom_call.1} parent=15 // pred_check_branch
          %99 = sbr.rel (%p97) target = $region20
        $region19: #{tpu_custom_call.1} parent=15 // pred_region
          %s100 = sand.u32 %s34, 1
          %s101 = scalar_lea.sflag [#allocation3], %s100
          %s102 = sand.u32 %s34, 1
          %s103 = smul.addr %s102, 128
          %s104 = scalar_lea.vmem [#allocation2], %s103
          %s106 = ssub.s32 2048, 2048
          %107 = vsyncadd %s101, %s106
          %s108 = smul.addr %s18, 16
          %s109 = smul.addr %s17, 48
          %s110 = sadd.s32 %s108, %s109
          %s111 = smul.addr %s110, 128
          %s112 = scalar_lea.hbm %s0, %s111
          %s113 = sshll.u32 %s104, 4
          %s114 = int_to_ptr.vmem [resolvable:$true] %s113
          %119 = dma.hbm_to_vmem [thread:$0]  %s112, 2048, %s114, %s101, 128, 128, 8
        $region20: #{tpu_custom_call.1} parent=15 // pred_fallthru
          _
      $region16: #{tpu_custom_call.1} parent=5 // pred_fallthru
        _
      %p120 = scmp.le.s32.totalorder 1, %s10
      %p121 = scmp.lt.s32.totalorder %s10, 7
      %p122 = pnand %p120, %p121
      %p123 = pneg %p122
      // Predicated region
      $region21: #{tpu_custom_call.1} parent=5 // pred_check
        _
      $region22: #{tpu_custom_call.1} parent=5 // pred_check_branch
        %125 = sbr.rel (%p122) target = $region24
      $region23: #{tpu_custom_call.1} parent=5 // pred_region
        %s126 = ssub.s32 %s10, 1
        %s127 = sand.u32 %s37, 1
        %s128 = scalar_lea.sflag [#allocation3], %s127
        %s129 = sand.u32 %s37, 1
        %s130 = smul.addr %s129, 128
        %s131 = scalar_lea.vmem [#allocation2], %s130
        // Predicated region
        $region25: #{tpu_custom_call.1} parent=23 // pred_check
          %p132 = pneg %p50
        $region26: #{tpu_custom_call.1} parent=23 // pred_check_branch
          %134 = sbr.rel (%p132) target = $region28
        $region27: #{tpu_custom_call.1} parent=23 // pred_region
          %135 = dma.done %s128, 2048
        $region28: #{tpu_custom_call.1} parent=23 // pred_fallthru
          _
        %s136 = sand.u32 %s37, 1
        %s137 = scalar_lea.sflag [#allocation3], %s136
        %s138 = sand.u32 %s37, 1
        %s139 = smul.addr %s138, 128
        %s140 = scalar_lea.vmem [#allocation2], %s139
        %p141 = pneg %p50
        %p142 = pneg %p47
        %p143 = pneg %p78
        %p144 = pneg %p75
        %p145 = scmp.lt.s32.totalorder %s19, 1
        %s146 = scalar_select %p145, %s19, 1
        %p147 = scmp.lt.s32.totalorder %s20, 2
        %s148 = scalar_select %p147, %s20, 2
        %s149 = smul.addr %s148, 32
        %s150 = smul.addr %s146, 96
        %s151 = sadd.s32 %s149, %s150
        %s152 = smul.addr %s151, 8
        %s153 = scalar_lea.vmem %s1, %s152
        %p154 = scmp.lt.s32.totalorder %s19, 1
        %s155 = scalar_select %p154, %s19, 1
        %p156 = scmp.lt.s32.totalorder %s20, 2
        %s157 = scalar_select %p156, %s20, 2
        %s158 = smul.addr %s157, 32
        %s159 = smul.addr %s155, 96
        %s160 = sadd.s32 %s158, %s159
        %s161 = smul.addr %s160, 8
        %s162 = scalar_lea.vmem %s1, %s161
        %v163 = vld [vmem:[%s131] sm:$0xff]
        %v164 = vld [vmem:[%s131 + $0x8] sm:$0xff]
        %v165 = vld [vmem:[%s131 + $0x10] sm:$0xff]
        %v166 = vld [vmem:[%s131 + $0x18] sm:$0xff]
        %v167 = vld [vmem:[%s131 + $0x20] sm:$0xff]
        %v168 = vld [vmem:[%s131 + $0x28] sm:$0xff]
        %v169 = vld [vmem:[%s131 + $0x30] sm:$0xff]
        %v170 = vld [vmem:[%s131 + $0x38] sm:$0xff]
        %v171 = vld [vmem:[%s131 + $0x40] sm:$0xff]
        %v172 = vld [vmem:[%s131 + $0x48] sm:$0xff]
        %v173 = vld [vmem:[%s131 + $0x50] sm:$0xff]
        %v174 = vld [vmem:[%s131 + $0x58] sm:$0xff]
        %v175 = vld [vmem:[%s131 + $0x60] sm:$0xff]
        %v176 = vld [vmem:[%s131 + $0x68] sm:$0xff]
        %v177 = vld [vmem:[%s131 + $0x70] sm:$0xff]
        %v178 = vld [vmem:[%s131 + $0x78] sm:$0xff]
        %179 = vxpose.xlu0.b32.start [1/16] %v163, 128
        %180 = vxpose.xlu0.b32.cont [2/16] %v164, 128
        %181 = vxpose.xlu0.b32.cont [3/16] 0.0, 128
        %182 = vxpose.xlu0.b32.cont [4/16] 0.0, 128
        %183 = vxpose.xlu0.b32.cont [5/16] 0.0, 128
        %184 = vxpose.xlu0.b32.cont [6/16] 0.0, 128
        %185 = vxpose.xlu0.b32.cont [7/16] 0.0, 128
        %186 = vxpose.xlu0.b32.cont [8/16] 0.0, 128
        %187 = vxpose.xlu0.b32.cont [9/16] 0.0, 128
        %188 = vxpose.xlu0.b32.cont [10/16] 0.0, 128
        %189 = vxpose.xlu0.b32.cont [11/16] 0.0, 128
        %190 = vxpose.xlu0.b32.cont [12/16] 0.0, 128
        %191 = vxpose.xlu0.b32.cont [13/16] 0.0, 128
        %192 = vxpose.xlu0.b32.cont [14/16] 0.0, 128
        %193 = vxpose.xlu0.b32.cont [15/16] 0.0, 128
        %194 = vxpose.xlu0.b32.end [16/16] 0.0, 128
        %v195 = vpop.trf.xlu0
        %v196 = vpop.trf.xlu0
        %v197 = vpop.trf.xlu0
        %v198 = vpop.trf.xlu0
        %v199 = vpop.trf.xlu0
        %v200 = vpop.trf.xlu0
        %v201 = vpop.trf.xlu0
        %v202 = vpop.trf.xlu0
        %v203 = vpop.trf.xlu0
        %v204 = vpop.trf.xlu0
        %v205 = vpop.trf.xlu0
        %v206 = vpop.trf.xlu0
        %v207 = vpop.trf.xlu0
        %v208 = vpop.trf.xlu0
        %v209 = vpop.trf.xlu0
        %v210 = vpop.trf.xlu0
        %211 = vxpose.xlu0.b32.start [1/16] %v165, 128
        %212 = vxpose.xlu0.b32.cont [2/16] %v166, 128
        %213 = vxpose.xlu0.b32.cont [3/16] 0.0, 128
        %214 = vxpose.xlu0.b32.cont [4/16] 0.0, 128
        %215 = vxpose.xlu0.b32.cont [5/16] 0.0, 128
        %216 = vxpose.xlu0.b32.cont [6/16] 0.0, 128
        %217 = vxpose.xlu0.b32.cont [7/16] 0.0, 128
        %218 = vxpose.xlu0.b32.cont [8/16] 0.0, 128
        %219 = vxpose.xlu0.b32.cont [9/16] 0.0, 128
        %220 = vxpose.xlu0.b32.cont [10/16] 0.0, 128
        %221 = vxpose.xlu0.b32.cont [11/16] 0.0, 128
        %222 = vxpose.xlu0.b32.cont [12/16] 0.0, 128
        %223 = vxpose.xlu0.b32.cont [13/16] 0.0, 128
        %224 = vxpose.xlu0.b32.cont [14/16] 0.0, 128
        %225 = vxpose.xlu0.b32.cont [15/16] 0.0, 128
        %226 = vxpose.xlu0.b32.end [16/16] 0.0, 128
        %v227 = vpop.trf.xlu0
        %v228 = vpop.trf.xlu0
        %v229 = vpop.trf.xlu0
        %v230 = vpop.trf.xlu0
        %v231 = vpop.trf.xlu0
        %v232 = vpop.trf.xlu0
        %v233 = vpop.trf.xlu0
        %v234 = vpop.trf.xlu0
        %v235 = vpop.trf.xlu0
        %v236 = vpop.trf.xlu0
        %v237 = vpop.trf.xlu0
        %v238 = vpop.trf.xlu0
        %v239 = vpop.trf.xlu0
        %v240 = vpop.trf.xlu0
        %v241 = vpop.trf.xlu0
        %v242 = vpop.trf.xlu0
        %243 = vxpose.xlu0.b32.start [1/16] %v167, 128
        %244 = vxpose.xlu0.b32.cont [2/16] %v168, 128
        %245 = vxpose.xlu0.b32.cont [3/16] 0.0, 128
        %246 = vxpose.xlu0.b32.cont [4/16] 0.0, 128
        %247 = vxpose.xlu0.b32.cont [5/16] 0.0, 128
        %248 = vxpose.xlu0.b32.cont [6/16] 0.0, 128
        %249 = vxpose.xlu0.b32.cont [7/16] 0.0, 128
        %250 = vxpose.xlu0.b32.cont [8/16] 0.0, 128
        %251 = vxpose.xlu0.b32.cont [9/16] 0.0, 128
        %252 = vxpose.xlu0.b32.cont [10/16] 0.0, 128
        %253 = vxpose.xlu0.b32.cont [11/16] 0.0, 128
        %254 = vxpose.xlu0.b32.cont [12/16] 0.0, 128
        %255 = vxpose.xlu0.b32.cont [13/16] 0.0, 128
        %256 = vxpose.xlu0.b32.cont [14/16] 0.0, 128
        %257 = vxpose.xlu0.b32.cont [15/16] 0.0, 128
        %258 = vxpose.xlu0.b32.end [16/16] 0.0, 128
        %v259 = vpop.trf.xlu0
        %v260 = vpop.trf.xlu0
        %v261 = vpop.trf.xlu0
        %v262 = vpop.trf.xlu0
        %v263 = vpop.trf.xlu0
        %v264 = vpop.trf.xlu0
        %v265 = vpop.trf.xlu0
        %v266 = vpop.trf.xlu0
        %v267 = vpop.trf.xlu0
        %v268 = vpop.trf.xlu0
        %v269 = vpop.trf.xlu0
        %v270 = vpop.trf.xlu0
        %v271 = vpop.trf.xlu0
        %v272 = vpop.trf.xlu0
        %v273 = vpop.trf.xlu0
        %v274 = vpop.trf.xlu0
        %275 = vxpose.xlu0.b32.start [1/16] %v169, 128
        %276 = vxpose.xlu0.b32.cont [2/16] %v170, 128
        %277 = vxpose.xlu0.b32.cont [3/16] 0.0, 128
        %278 = vxpose.xlu0.b32.cont [4/16] 0.0, 128
        %279 = vxpose.xlu0.b32.cont [5/16] 0.0, 128
        %280 = vxpose.xlu0.b32.cont [6/16] 0.0, 128
        %281 = vxpose.xlu0.b32.cont [7/16] 0.0, 128
        %282 = vxpose.xlu0.b32.cont [8/16] 0.0, 128
        %283 = vxpose.xlu0.b32.cont [9/16] 0.0, 128
        %284 = vxpose.xlu0.b32.cont [10/16] 0.0, 128
        %285 = vxpose.xlu0.b32.cont [11/16] 0.0, 128
        %286 = vxpose.xlu0.b32.cont [12/16] 0.0, 128
        %287 = vxpose.xlu0.b32.cont [13/16] 0.0, 128
        %288 = vxpose.xlu0.b32.cont [14/16] 0.0, 128
        %289 = vxpose.xlu0.b32.cont [15/16] 0.0, 128
        %290 = vxpose.xlu0.b32.end [16/16] 0.0, 128
        %v291 = vpop.trf.xlu0
        %v292 = vpop.trf.xlu0
        %v293 = vpop.trf.xlu0
        %v294 = vpop.trf.xlu0
        %v295 = vpop.trf.xlu0
        %v296 = vpop.trf.xlu0
        %v297 = vpop.trf.xlu0
        %v298 = vpop.trf.xlu0
        %v299 = vpop.trf.xlu0
        %v300 = vpop.trf.xlu0
        %v301 = vpop.trf.xlu0
        %v302 = vpop.trf.xlu0
        %v303 = vpop.trf.xlu0
        %v304 = vpop.trf.xlu0
        %v305 = vpop.trf.xlu0
        %v306 = vpop.trf.xlu0
        %307 = vxpose.xlu0.b32.start [1/16] %v171, 128
        %308 = vxpose.xlu0.b32.cont [2/16] %v172, 128
        %309 = vxpose.xlu0.b32.cont [3/16] 0.0, 128
        %310 = vxpose.xlu0.b32.cont [4/16] 0.0, 128
        %311 = vxpose.xlu0.b32.cont [5/16] 0.0, 128
        %312 = vxpose.xlu0.b32.cont [6/16] 0.0, 128
        %313 = vxpose.xlu0.b32.cont [7/16] 0.0, 128
        %314 = vxpose.xlu0.b32.cont [8/16] 0.0, 128
        %315 = vxpose.xlu0.b32.cont [9/16] 0.0, 128
        %316 = vxpose.xlu0.b32.cont [10/16] 0.0, 128
        %317 = vxpose.xlu0.b32.cont [11/16] 0.0, 128
        %318 = vxpose.xlu0.b32.cont [12/16] 0.0, 128
        %319 = vxpose.xlu0.b32.cont [13/16] 0.0, 128
        %320 = vxpose.xlu0.b32.cont [14/16] 0.0, 128
        %321 = vxpose.xlu0.b32.cont [15/16] 0.0, 128
        %322 = vxpose.xlu0.b32.end [16/16] 0.0, 128
        %v323 = vpop.trf.xlu0
        %v324 = vpop.trf.xlu0
        %v325 = vpop.trf.xlu0
        %v326 = vpop.trf.xlu0
        %v327 = vpop.trf.xlu0
        %v328 = vpop.trf.xlu0
        %v329 = vpop.trf.xlu0
        %v330 = vpop.trf.xlu0
        %v331 = vpop.trf.xlu0
        %v332 = vpop.trf.xlu0
        %v333 = vpop.trf.xlu0
        %v334 = vpop.trf.xlu0
        %v335 = vpop.trf.xlu0
        %v336 = vpop.trf.xlu0
        %v337 = vpop.trf.xlu0
        %v338 = vpop.trf.xlu0
        %339 = vxpose.xlu0.b32.start [1/16] %v173, 128
        %340 = vxpose.xlu0.b32.cont [2/16] %v174, 128
        %341 = vxpose.xlu0.b32.cont [3/16] 0.0, 128
        %342 = vxpose.xlu0.b32.cont [4/16] 0.0, 128
        %343 = vxpose.xlu0.b32.cont [5/16] 0.0, 128
        %344 = vxpose.xlu0.b32.cont [6/16] 0.0, 128
        %345 = vxpose.xlu0.b32.cont [7/16] 0.0, 128
        %346 = vxpose.xlu0.b32.cont [8/16] 0.0, 128
        %347 = vxpose.xlu0.b32.cont [9/16] 0.0, 128
        %348 = vxpose.xlu0.b32.cont [10/16] 0.0, 128
        %349 = vxpose.xlu0.b32.cont [11/16] 0.0, 128
        %350 = vxpose.xlu0.b32.cont [12/16] 0.0, 128
        %351 = vxpose.xlu0.b32.cont [13/16] 0.0, 128
        %352 = vxpose.xlu0.b32.cont [14/16] 0.0, 128
        %353 = vxpose.xlu0.b32.cont [15/16] 0.0, 128
        %354 = vxpose.xlu0.b32.end [16/16] 0.0, 128
        %v355 = vpop.trf.xlu0
        %v356 = vpop.trf.xlu0
        %v357 = vpop.trf.xlu0
        %v358 = vpop.trf.xlu0
        %v359 = vpop.trf.xlu0
        %v360 = vpop.trf.xlu0
        %v361 = vpop.trf.xlu0
        %v362 = vpop.trf.xlu0
        %v363 = vpop.trf.xlu0
        %v364 = vpop.trf.xlu0
        %v365 = vpop.trf.xlu0
        %v366 = vpop.trf.xlu0
        %v367 = vpop.trf.xlu0
        %v368 = vpop.trf.xlu0
        %v369 = vpop.trf.xlu0
        %v370 = vpop.trf.xlu0
        %371 = vxpose.xlu0.b32.start [1/16] %v175, 128
        %372 = vxpose.xlu0.b32.cont [2/16] %v176, 128
        %373 = vxpose.xlu0.b32.cont [3/16] 0.0, 128
        %374 = vxpose.xlu0.b32.cont [4/16] 0.0, 128
        %375 = vxpose.xlu0.b32.cont [5/16] 0.0, 128
        %376 = vxpose.xlu0.b32.cont [6/16] 0.0, 128
        %377 = vxpose.xlu0.b32.cont [7/16] 0.0, 128
        %378 = vxpose.xlu0.b32.cont [8/16] 0.0, 128
        %379 = vxpose.xlu0.b32.cont [9/16] 0.0, 128
        %380 = vxpose.xlu0.b32.cont [10/16] 0.0, 128
        %381 = vxpose.xlu0.b32.cont [11/16] 0.0, 128
        %382 = vxpose.xlu0.b32.cont [12/16] 0.0, 128
        %383 = vxpose.xlu0.b32.cont [13/16] 0.0, 128
        %384 = vxpose.xlu0.b32.cont [14/16] 0.0, 128
        %385 = vxpose.xlu0.b32.cont [15/16] 0.0, 128
        %386 = vxpose.xlu0.b32.end [16/16] 0.0, 128
        %v387 = vpop.trf.xlu0
        %v388 = vpop.trf.xlu0
        %v389 = vpop.trf.xlu0
        %v390 = vpop.trf.xlu0
        %v391 = vpop.trf.xlu0
        %v392 = vpop.trf.xlu0
        %v393 = vpop.trf.xlu0
        %v394 = vpop.trf.xlu0
        %v395 = vpop.trf.xlu0
        %v396 = vpop.trf.xlu0
        %v397 = vpop.trf.xlu0
        %v398 = vpop.trf.xlu0
        %v399 = vpop.trf.xlu0
        %v400 = vpop.trf.xlu0
        %v401 = vpop.trf.xlu0
        %v402 = vpop.trf.xlu0
        %403 = vxpose.xlu0.b32.start [1/16] %v177, 128
        %404 = vxpose.xlu0.b32.cont [2/16] %v178, 128
        %405 = vxpose.xlu0.b32.cont [3/16] 0.0, 128
        %406 = vxpose.xlu0.b32.cont [4/16] 0.0, 128
        %407 = vxpose.xlu0.b32.cont [5/16] 0.0, 128
        %408 = vxpose.xlu0.b32.cont [6/16] 0.0, 128
        %409 = vxpose.xlu0.b32.cont [7/16] 0.0, 128
        %410 = vxpose.xlu0.b32.cont [8/16] 0.0, 128
        %411 = vxpose.xlu0.b32.cont [9/16] 0.0, 128
        %412 = vxpose.xlu0.b32.cont [10/16] 0.0, 128
        %413 = vxpose.xlu0.b32.cont [11/16] 0.0, 128
        %414 = vxpose.xlu0.b32.cont [12/16] 0.0, 128
        %415 = vxpose.xlu0.b32.cont [13/16] 0.0, 128
        %416 = vxpose.xlu0.b32.cont [14/16] 0.0, 128
        %417 = vxpose.xlu0.b32.cont [15/16] 0.0, 128
        %418 = vxpose.xlu0.b32.end [16/16] 0.0, 128
        %v419 = vpop.trf.xlu0
        %v420 = vpop.trf.xlu0
        %v421 = vpop.trf.xlu0
        %v422 = vpop.trf.xlu0
        %v423 = vpop.trf.xlu0
        %v424 = vpop.trf.xlu0
        %v425 = vpop.trf.xlu0
        %v426 = vpop.trf.xlu0
        %v427 = vpop.trf.xlu0
        %v428 = vpop.trf.xlu0
        %v429 = vpop.trf.xlu0
        %v430 = vpop.trf.xlu0
        %v431 = vpop.trf.xlu0
        %v432 = vpop.trf.xlu0
        %v433 = vpop.trf.xlu0
        %v434 = vpop.trf.xlu0
        %v435 = vcombine.low %v195, %v259
        %v436 = vcombine.high %v195, %v259
        %v438 = vunpack.c.l.s4 1983009808
        %v439 = vunpack.c.0.s8 %v438
        %v440 = vlaneseq
        %v441 = vshrl.u32 %v440, 7
        %v442 = vsub.s32 %v439, %v441
        %v443 = vrot.slane %v435, %v442
        %v445 = vunpack.c.l.s4 1983009808
        %v446 = vunpack.c.0.s8 %v445
        %v447 = vlaneseq
        %v448 = vshrl.u32 %v447, 7
        %v449 = vsub.s32 %v446, %v448
        %v450 = vrot.slane %v436, %v449
        %v451 = vcombine.low %v227, %v291
        %v452 = vcombine.high %v227, %v291
        %v454 = vunpack.c.l.s4 1983009808
        %v455 = vunpack.c.0.s8 %v454
        %v456 = vlaneseq
        %v457 = vshrl.u32 %v456, 7
        %v458 = vsub.s32 %v455, %v457
        %v459 = vrot.slane %v451, %v458
        %v461 = vunpack.c.l.s4 1983009808
        %v462 = vunpack.c.0.s8 %v461
        %v463 = vlaneseq
        %v464 = vshrl.u32 %v463, 7
        %v465 = vsub.s32 %v462, %v464
        %v466 = vrot.slane %v452, %v465
        %v467 = vcombine.low %v323, %v387
        %v468 = vcombine.high %v323, %v387
        %v470 = vunpack.c.l.s4 1983009808
        %v471 = vunpack.c.0.s8 %v470
        %v472 = vlaneseq
        %v473 = vshrl.u32 %v472, 7
        %v474 = vsub.s32 %v471, %v473
        %v475 = vrot.slane %v467, %v474
        %v477 = vunpack.c.l.s4 1983009808
        %v478 = vunpack.c.0.s8 %v477
        %v479 = vlaneseq
        %v480 = vshrl.u32 %v479, 7
        %v481 = vsub.s32 %v478, %v480
        %v482 = vrot.slane %v468, %v481
        %v483 = vcombine.low %v355, %v419
        %v484 = vcombine.high %v355, %v419
        %v486 = vunpack.c.l.s4 1983009808
        %v487 = vunpack.c.0.s8 %v486
        %v488 = vlaneseq
        %v489 = vshrl.u32 %v488, 7
        %v490 = vsub.s32 %v487, %v489
        %v491 = vrot.slane %v483, %v490
        %v493 = vunpack.c.l.s4 1983009808
        %v494 = vunpack.c.0.s8 %v493
        %v495 = vlaneseq
        %v496 = vshrl.u32 %v495, 7
        %v497 = vsub.s32 %v494, %v496
        %v498 = vrot.slane %v484, %v497
        %v499 = vcombine.low %v443, %v459
        %v500 = vcombine.high %v443, %v459
        %v502 = vunpack.c.l.s4 1934713408
        %v503 = vunpack.c.0.s8 %v502
        %v504 = vlaneseq
        %v505 = vshrl.u32 %v504, 7
        %v506 = vsub.s32 %v503, %v505
        %v507 = vrot.slane %v499, %v506
        %v509 = vunpack.c.l.s4 1934713408
        %v510 = vunpack.c.0.s8 %v509
        %v511 = vlaneseq
        %v512 = vshrl.u32 %v511, 7
        %v513 = vsub.s32 %v510, %v512
        %v514 = vrot.slane %v500, %v513
        %v515 = vcombine.low %v450, %v466
        %v516 = vcombine.high %v450, %v466
        %v518 = vunpack.c.l.s4 1934713408
        %v519 = vunpack.c.0.s8 %v518
        %v520 = vlaneseq
        %v521 = vshrl.u32 %v520, 7
        %v522 = vsub.s32 %v519, %v521
        %v523 = vrot.slane %v515, %v522
        %v525 = vunpack.c.l.s4 1934713408
        %v526 = vunpack.c.0.s8 %v525
        %v527 = vlaneseq
        %v528 = vshrl.u32 %v527, 7
        %v529 = vsub.s32 %v526, %v528
        %v530 = vrot.slane %v516, %v529
        %v531 = vcombine.low %v475, %v491
        %v532 = vcombine.high %v475, %v491
        %v534 = vunpack.c.l.s4 1934713408
        %v535 = vunpack.c.0.s8 %v534
        %v536 = vlaneseq
        %v537 = vshrl.u32 %v536, 7
        %v538 = vsub.s32 %v535, %v537
        %v539 = vrot.slane %v531, %v538
        %v541 = vunpack.c.l.s4 1934713408
        %v542 = vunpack.c.0.s8 %v541
        %v543 = vlaneseq
        %v544 = vshrl.u32 %v543, 7
        %v545 = vsub.s32 %v542, %v544
        %v546 = vrot.slane %v532, %v545
        %v547 = vcombine.low %v482, %v498
        %v548 = vcombine.high %v482, %v498
        %v550 = vunpack.c.l.s4 1934713408
        %v551 = vunpack.c.0.s8 %v550
        %v552 = vlaneseq
        %v553 = vshrl.u32 %v552, 7
        %v554 = vsub.s32 %v551, %v553
        %v555 = vrot.slane %v547, %v554
        %v557 = vunpack.c.l.s4 1934713408
        %v558 = vunpack.c.0.s8 %v557
        %v559 = vlaneseq
        %v560 = vshrl.u32 %v559, 7
        %v561 = vsub.s32 %v558, %v560
        %v562 = vrot.slane %v548, %v561
        %v563 = vcombine.low %v507, %v539
        %v564 = vcombine.high %v507, %v539
        %v565 = vcombine.low %v514, %v546
        %v566 = vcombine.high %v514, %v546
        %v567 = vcombine.low %v523, %v555
        %v568 = vcombine.high %v523, %v555
        %v569 = vcombine.low %v530, %v562
        %v570 = vcombine.high %v530, %v562
        %v571 = vcombine.low %v196, %v260
        %v572 = vcombine.high %v196, %v260
        %v574 = vunpack.c.l.s4 1983009808
        %v575 = vunpack.c.0.s8 %v574
        %v576 = vlaneseq
        %v577 = vshrl.u32 %v576, 7
        %v578 = vsub.s32 %v575, %v577
        %v579 = vrot.slane %v571, %v578
        %v581 = vunpack.c.l.s4 1983009808
        %v582 = vunpack.c.0.s8 %v581
        %v583 = vlaneseq
        %v584 = vshrl.u32 %v583, 7
        %v585 = vsub.s32 %v582, %v584
        %v586 = vrot.slane %v572, %v585
        %v587 = vcombine.low %v228, %v292
        %v588 = vcombine.high %v228, %v292
        %v590 = vunpack.c.l.s4 1983009808
        %v591 = vunpack.c.0.s8 %v590
        %v592 = vlaneseq
        %v593 = vshrl.u32 %v592, 7
        %v594 = vsub.s32 %v591, %v593
        %v595 = vrot.slane %v587, %v594
        %v597 = vunpack.c.l.s4 1983009808
        %v598 = vunpack.c.0.s8 %v597
        %v599 = vlaneseq
        %v600 = vshrl.u32 %v599, 7
        %v601 = vsub.s32 %v598, %v600
        %v602 = vrot.slane %v588, %v601
        %v603 = vcombine.low %v324, %v388
        %v604 = vcombine.high %v324, %v388
        %v606 = vunpack.c.l.s4 1983009808
        %v607 = vunpack.c.0.s8 %v606
        %v608 = vlaneseq
        %v609 = vshrl.u32 %v608, 7
        %v610 = vsub.s32 %v607, %v609
        %v611 = vrot.slane %v603, %v610
        %v613 = vunpack.c.l.s4 1983009808
        %v614 = vunpack.c.0.s8 %v613
        %v615 = vlaneseq
        %v616 = vshrl.u32 %v615, 7
        %v617 = vsub.s32 %v614, %v616
        %v618 = vrot.slane %v604, %v617
        %v619 = vcombine.low %v356, %v420
        %v620 = vcombine.high %v356, %v420
        %v622 = vunpack.c.l.s4 1983009808
        %v623 = vunpack.c.0.s8 %v622
        %v624 = vlaneseq
        %v625 = vshrl.u32 %v624, 7
        %v626 = vsub.s32 %v623, %v625
        %v627 = vrot.slane %v619, %v626
        %v629 = vunpack.c.l.s4 1983009808
        %v630 = vunpack.c.0.s8 %v629
        %v631 = vlaneseq
        %v632 = vshrl.u32 %v631, 7
        %v633 = vsub.s32 %v630, %v632
        %v634 = vrot.slane %v620, %v633
        %v635 = vcombine.low %v579, %v595
        %v636 = vcombine.high %v579, %v595
        %v638 = vunpack.c.l.s4 1934713408
        %v639 = vunpack.c.0.s8 %v638
        %v640 = vlaneseq
        %v641 = vshrl.u32 %v640, 7
        %v642 = vsub.s32 %v639, %v641
        %v643 = vrot.slane %v635, %v642
        %v645 = vunpack.c.l.s4 1934713408
        %v646 = vunpack.c.0.s8 %v645
        %v647 = vlaneseq
        %v648 = vshrl.u32 %v647, 7
        %v649 = vsub.s32 %v646, %v648
        %v650 = vrot.slane %v636, %v649
        %v651 = vcombine.low %v586, %v602
        %v652 = vcombine.high %v586, %v602
        %v654 = vunpack.c.l.s4 1934713408
        %v655 = vunpack.c.0.s8 %v654
        %v656 = vlaneseq
        %v657 = vshrl.u32 %v656, 7
        %v658 = vsub.s32 %v655, %v657
        %v659 = vrot.slane %v651, %v658
        %v661 = vunpack.c.l.s4 1934713408
        %v662 = vunpack.c.0.s8 %v661
        %v663 = vlaneseq
        %v664 = vshrl.u32 %v663, 7
        %v665 = vsub.s32 %v662, %v664
        %v666 = vrot.slane %v652, %v665
        %v667 = vcombine.low %v611, %v627
        %v668 = vcombine.high %v611, %v627
        %v670 = vunpack.c.l.s4 1934713408
        %v671 = vunpack.c.0.s8 %v670
        %v672 = vlaneseq
        %v673 = vshrl.u32 %v672, 7
        %v674 = vsub.s32 %v671, %v673
        %v675 = vrot.slane %v667, %v674
        %v677 = vunpack.c.l.s4 1934713408
        %v678 = vunpack.c.0.s8 %v677
        %v679 = vlaneseq
        %v680 = vshrl.u32 %v679, 7
        %v681 = vsub.s32 %v678, %v680
        %v682 = vrot.slane %v668, %v681
        %v683 = vcombine.low %v618, %v634
        %v684 = vcombine.high %v618, %v634
        %v686 = vunpack.c.l.s4 1934713408
        %v687 = vunpack.c.0.s8 %v686
        %v688 = vlaneseq
        %v689 = vshrl.u32 %v688, 7
        %v690 = vsub.s32 %v687, %v689
        %v691 = vrot.slane %v683, %v690
        %v693 = vunpack.c.l.s4 1934713408
        %v694 = vunpack.c.0.s8 %v693
        %v695 = vlaneseq
        %v696 = vshrl.u32 %v695, 7
        %v697 = vsub.s32 %v694, %v696
        %v698 = vrot.slane %v684, %v697
        %v699 = vcombine.low %v643, %v675
        %v700 = vcombine.high %v643, %v675
        %v701 = vcombine.low %v650, %v682
        %v702 = vcombine.high %v650, %v682
        %v703 = vcombine.low %v659, %v691
        %v704 = vcombine.high %v659, %v691
        %v705 = vcombine.low %v666, %v698
        %v706 = vcombine.high %v666, %v698
        %707 = vxpose.xlu0.b32.start [1/16] %v563, 128
        %708 = vxpose.xlu0.b32.cont [2/16] 0.0, 128
        %709 = vxpose.xlu0.b32.cont [3/16] 0.0, 128
        %710 = vxpose.xlu0.b32.cont [4/16] 0.0, 128
        %711 = vxpose.xlu0.b32.cont [5/16] 0.0, 128
        %712 = vxpose.xlu0.b32.cont [6/16] 0.0, 128
        %713 = vxpose.xlu0.b32.cont [7/16] 0.0, 128
        %714 = vxpose.xlu0.b32.cont [8/16] 0.0, 128
        %715 = vxpose.xlu0.b32.cont [9/16] 0.0, 128
        %716 = vxpose.xlu0.b32.cont [10/16] 0.0, 128
        %717 = vxpose.xlu0.b32.cont [11/16] 0.0, 128
        %718 = vxpose.xlu0.b32.cont [12/16] 0.0, 128
        %719 = vxpose.xlu0.b32.cont [13/16] 0.0, 128
        %720 = vxpose.xlu0.b32.cont [14/16] 0.0, 128
        %721 = vxpose.xlu0.b32.cont [15/16] 0.0, 128
        %722 = vxpose.xlu0.b32.end [16/16] 0.0, 128
        %v723 = vpop.trf.xlu0
        %v724 = vpop.trf.xlu0
        %v725 = vpop.trf.xlu0
        %v726 = vpop.trf.xlu0
        %v727 = vpop.trf.xlu0
        %v728 = vpop.trf.xlu0
        %v729 = vpop.trf.xlu0
        %v730 = vpop.trf.xlu0
        %v731 = vpop.trf.xlu0
        %v732 = vpop.trf.xlu0
        %v733 = vpop.trf.xlu0
        %v734 = vpop.trf.xlu0
        %v735 = vpop.trf.xlu0
        %v736 = vpop.trf.xlu0
        %v737 = vpop.trf.xlu0
        %v738 = vpop.trf.xlu0
        %739 = vxpose.xlu0.b32.start [1/16] %v564, 128
        %740 = vxpose.xlu0.b32.cont [2/16] 0.0, 128
        %741 = vxpose.xlu0.b32.cont [3/16] 0.0, 128
        %742 = vxpose.xlu0.b32.cont [4/16] 0.0, 128
        %743 = vxpose.xlu0.b32.cont [5/16] 0.0, 128
        %744 = vxpose.xlu0.b32.cont [6/16] 0.0, 128
        %745 = vxpose.xlu0.b32.cont [7/16] 0.0, 128
        %746 = vxpose.xlu0.b32.cont [8/16] 0.0, 128
        %747 = vxpose.xlu0.b32.cont [9/16] 0.0, 128
        %748 = vxpose.xlu0.b32.cont [10/16] 0.0, 128
        %749 = vxpose.xlu0.b32.cont [11/16] 0.0, 128
        %750 = vxpose.xlu0.b32.cont [12/16] 0.0, 128
        %751 = vxpose.xlu0.b32.cont [13/16] 0.0, 128
        %752 = vxpose.xlu0.b32.cont [14/16] 0.0, 128
        %753 = vxpose.xlu0.b32.cont [15/16] 0.0, 128
        %754 = vxpose.xlu0.b32.end [16/16] 0.0, 128
        %v755 = vpop.trf.xlu0
        %v756 = vpop.trf.xlu0
        %v757 = vpop.trf.xlu0
        %v758 = vpop.trf.xlu0
        %v759 = vpop.trf.xlu0
        %v760 = vpop.trf.xlu0
        %v761 = vpop.trf.xlu0
        %v762 = vpop.trf.xlu0
        %v763 = vpop.trf.xlu0
        %v764 = vpop.trf.xlu0
        %v765 = vpop.trf.xlu0
        %v766 = vpop.trf.xlu0
        %v767 = vpop.trf.xlu0
        %v768 = vpop.trf.xlu0
        %v769 = vpop.trf.xlu0
        %v770 = vpop.trf.xlu0
        %771 = vxpose.xlu0.b32.start [1/16] %v565, 128
        %772 = vxpose.xlu0.b32.cont [2/16] 0.0, 128
        %773 = vxpose.xlu0.b32.cont [3/16] 0.0, 128
        %774 = vxpose.xlu0.b32.cont [4/16] 0.0, 128
        %775 = vxpose.xlu0.b32.cont [5/16] 0.0, 128
        %776 = vxpose.xlu0.b32.cont [6/16] 0.0, 128
        %777 = vxpose.xlu0.b32.cont [7/16] 0.0, 128
        %778 = vxpose.xlu0.b32.cont [8/16] 0.0, 128
        %779 = vxpose.xlu0.b32.cont [9/16] 0.0, 128
        %780 = vxpose.xlu0.b32.cont [10/16] 0.0, 128
        %781 = vxpose.xlu0.b32.cont [11/16] 0.0, 128
        %782 = vxpose.xlu0.b32.cont [12/16] 0.0, 128
        %783 = vxpose.xlu0.b32.cont [13/16] 0.0, 128
        %784 = vxpose.xlu0.b32.cont [14/16] 0.0, 128
        %785 = vxpose.xlu0.b32.cont [15/16] 0.0, 128
        %786 = vxpose.xlu0.b32.end [16/16] 0.0, 128
        %v787 = vpop.trf.xlu0
        %v788 = vpop.trf.xlu0
        %v789 = vpop.trf.xlu0
        %v790 = vpop.trf.xlu0
        %v791 = vpop.trf.xlu0
        %v792 = vpop.trf.xlu0
        %v793 = vpop.trf.xlu0
        %v794 = vpop.trf.xlu0
        %v795 = vpop.trf.xlu0
        %v796 = vpop.trf.xlu0
        %v797 = vpop.trf.xlu0
        %v798 = vpop.trf.xlu0
        %v799 = vpop.trf.xlu0
        %v800 = vpop.trf.xlu0
        %v801 = vpop.trf.xlu0
        %v802 = vpop.trf.xlu0
        %803 = vxpose.xlu0.b32.start [1/16] %v566, 128
        %804 = vxpose.xlu0.b32.cont [2/16] 0.0, 128
        %805 = vxpose.xlu0.b32.cont [3/16] 0.0, 128
        %806 = vxpose.xlu0.b32.cont [4/16] 0.0, 128
        %807 = vxpose.xlu0.b32.cont [5/16] 0.0, 128
        %808 = vxpose.xlu0.b32.cont [6/16] 0.0, 128
        %809 = vxpose.xlu0.b32.cont [7/16] 0.0, 128
        %810 = vxpose.xlu0.b32.cont [8/16] 0.0, 128
        %811 = vxpose.xlu0.b32.cont [9/16] 0.0, 128
        %812 = vxpose.xlu0.b32.cont [10/16] 0.0, 128
        %813 = vxpose.xlu0.b32.cont [11/16] 0.0, 128
        %814 = vxpose.xlu0.b32.cont [12/16] 0.0, 128
        %815 = vxpose.xlu0.b32.cont [13/16] 0.0, 128
        %816 = vxpose.xlu0.b32.cont [14/16] 0.0, 128
        %817 = vxpose.xlu0.b32.cont [15/16] 0.0, 128
        %818 = vxpose.xlu0.b32.end [16/16] 0.0, 128
        %v819 = vpop.trf.xlu0
        %v820 = vpop.trf.xlu0
        %v821 = vpop.trf.xlu0
        %v822 = vpop.trf.xlu0
        %v823 = vpop.trf.xlu0
        %v824 = vpop.trf.xlu0
        %v825 = vpop.trf.xlu0
        %v826 = vpop.trf.xlu0
        %v827 = vpop.trf.xlu0
        %v828 = vpop.trf.xlu0
        %v829 = vpop.trf.xlu0
        %v830 = vpop.trf.xlu0
        %v831 = vpop.trf.xlu0
        %v832 = vpop.trf.xlu0
        %v833 = vpop.trf.xlu0
        %v834 = vpop.trf.xlu0
        %835 = vxpose.xlu0.b32.start [1/16] %v567, 128
        %836 = vxpose.xlu0.b32.cont [2/16] 0.0, 128
        %837 = vxpose.xlu0.b32.cont [3/16] 0.0, 128
        %838 = vxpose.xlu0.b32.cont [4/16] 0.0, 128
        %839 = vxpose.xlu0.b32.cont [5/16] 0.0, 128
        %840 = vxpose.xlu0.b32.cont [6/16] 0.0, 128
        %841 = vxpose.xlu0.b32.cont [7/16] 0.0, 128
        %842 = vxpose.xlu0.b32.cont [8/16] 0.0, 128
        %843 = vxpose.xlu0.b32.cont [9/16] 0.0, 128
        %844 = vxpose.xlu0.b32.cont [10/16] 0.0, 128
        %845 = vxpose.xlu0.b32.cont [11/16] 0.0, 128
        %846 = vxpose.xlu0.b32.cont [12/16] 0.0, 128
        %847 = vxpose.xlu0.b32.cont [13/16] 0.0, 128
        %848 = vxpose.xlu0.b32.cont [14/16] 0.0, 128
        %849 = vxpose.xlu0.b32.cont [15/16] 0.0, 128
        %850 = vxpose.xlu0.b32.end [16/16] 0.0, 128
        %v851 = vpop.trf.xlu0
        %v852 = vpop.trf.xlu0
        %v853 = vpop.trf.xlu0
        %v854 = vpop.trf.xlu0
        %v855 = vpop.trf.xlu0
        %v856 = vpop.trf.xlu0
        %v857 = vpop.trf.xlu0
        %v858 = vpop.trf.xlu0
        %v859 = vpop.trf.xlu0
        %v860 = vpop.trf.xlu0
        %v861 = vpop.trf.xlu0
        %v862 = vpop.trf.xlu0
        %v863 = vpop.trf.xlu0
        %v864 = vpop.trf.xlu0
        %v865 = vpop.trf.xlu0
        %v866 = vpop.trf.xlu0
        %867 = vxpose.xlu0.b32.start [1/16] %v568, 128
        %868 = vxpose.xlu0.b32.cont [2/16] 0.0, 128
        %869 = vxpose.xlu0.b32.cont [3/16] 0.0, 128
        %870 = vxpose.xlu0.b32.cont [4/16] 0.0, 128
        %871 = vxpose.xlu0.b32.cont [5/16] 0.0, 128
        %872 = vxpose.xlu0.b32.cont [6/16] 0.0, 128
        %873 = vxpose.xlu0.b32.cont [7/16] 0.0, 128
        %874 = vxpose.xlu0.b32.cont [8/16] 0.0, 128
        %875 = vxpose.xlu0.b32.cont [9/16] 0.0, 128
        %876 = vxpose.xlu0.b32.cont [10/16] 0.0, 128
        %877 = vxpose.xlu0.b32.cont [11/16] 0.0, 128
        %878 = vxpose.xlu0.b32.cont [12/16] 0.0, 128
        %879 = vxpose.xlu0.b32.cont [13/16] 0.0, 128
        %880 = vxpose.xlu0.b32.cont [14/16] 0.0, 128
        %881 = vxpose.xlu0.b32.cont [15/16] 0.0, 128
        %882 = vxpose.xlu0.b32.end [16/16] 0.0, 128
        %v883 = vpop.trf.xlu0
        %v884 = vpop.trf.xlu0
        %v885 = vpop.trf.xlu0
        %v886 = vpop.trf.xlu0
        %v887 = vpop.trf.xlu0
        %v888 = vpop.trf.xlu0
        %v889 = vpop.trf.xlu0
        %v890 = vpop.trf.xlu0
        %v891 = vpop.trf.xlu0
        %v892 = vpop.trf.xlu0
        %v893 = vpop.trf.xlu0
        %v894 = vpop.trf.xlu0
        %v895 = vpop.trf.xlu0
        %v896 = vpop.trf.xlu0
        %v897 = vpop.trf.xlu0
        %v898 = vpop.trf.xlu0
        %899 = vxpose.xlu0.b32.start [1/16] %v569, 128
        %900 = vxpose.xlu0.b32.cont [2/16] 0.0, 128
        %901 = vxpose.xlu0.b32.cont [3/16] 0.0, 128
        %902 = vxpose.xlu0.b32.cont [4/16] 0.0, 128
        %903 = vxpose.xlu0.b32.cont [5/16] 0.0, 128
        %904 = vxpose.xlu0.b32.cont [6/16] 0.0, 128
        %905 = vxpose.xlu0.b32.cont [7/16] 0.0, 128
        %906 = vxpose.xlu0.b32.cont [8/16] 0.0, 128
        %907 = vxpose.xlu0.b32.cont [9/16] 0.0, 128
        %908 = vxpose.xlu0.b32.cont [10/16] 0.0, 128
        %909 = vxpose.xlu0.b32.cont [11/16] 0.0, 128
        %910 = vxpose.xlu0.b32.cont [12/16] 0.0, 128
        %911 = vxpose.xlu0.b32.cont [13/16] 0.0, 128
        %912 = vxpose.xlu0.b32.cont [14/16] 0.0, 128
        %913 = vxpose.xlu0.b32.cont [15/16] 0.0, 128
        %914 = vxpose.xlu0.b32.end [16/16] 0.0, 128
        %v915 = vpop.trf.xlu0
        %v916 = vpop.trf.xlu0
        %v917 = vpop.trf.xlu0
        %v918 = vpop.trf.xlu0
        %v919 = vpop.trf.xlu0
        %v920 = vpop.trf.xlu0
        %v921 = vpop.trf.xlu0
        %v922 = vpop.trf.xlu0
        %v923 = vpop.trf.xlu0
        %v924 = vpop.trf.xlu0
        %v925 = vpop.trf.xlu0
        %v926 = vpop.trf.xlu0
        %v927 = vpop.trf.xlu0
        %v928 = vpop.trf.xlu0
        %v929 = vpop.trf.xlu0
        %v930 = vpop.trf.xlu0
        %931 = vxpose.xlu0.b32.start [1/16] %v570, 128
        %932 = vxpose.xlu0.b32.cont [2/16] 0.0, 128
        %933 = vxpose.xlu0.b32.cont [3/16] 0.0, 128
        %934 = vxpose.xlu0.b32.cont [4/16] 0.0, 128
        %935 = vxpose.xlu0.b32.cont [5/16] 0.0, 128
        %936 = vxpose.xlu0.b32.cont [6/16] 0.0, 128
        %937 = vxpose.xlu0.b32.cont [7/16] 0.0, 128
        %938 = vxpose.xlu0.b32.cont [8/16] 0.0, 128
        %939 = vxpose.xlu0.b32.cont [9/16] 0.0, 128
        %940 = vxpose.xlu0.b32.cont [10/16] 0.0, 128
        %941 = vxpose.xlu0.b32.cont [11/16] 0.0, 128
        %942 = vxpose.xlu0.b32.cont [12/16] 0.0, 128
        %943 = vxpose.xlu0.b32.cont [13/16] 0.0, 128
        %944 = vxpose.xlu0.b32.cont [14/16] 0.0, 128
        %945 = vxpose.xlu0.b32.cont [15/16] 0.0, 128
        %946 = vxpose.xlu0.b32.end [16/16] 0.0, 128
        %v947 = vpop.trf.xlu0
        %v948 = vpop.trf.xlu0
        %v949 = vpop.trf.xlu0
        %v950 = vpop.trf.xlu0
        %v951 = vpop.trf.xlu0
        %v952 = vpop.trf.xlu0
        %v953 = vpop.trf.xlu0
        %v954 = vpop.trf.xlu0
        %v955 = vpop.trf.xlu0
        %v956 = vpop.trf.xlu0
        %v957 = vpop.trf.xlu0
        %v958 = vpop.trf.xlu0
        %v959 = vpop.trf.xlu0
        %v960 = vpop.trf.xlu0
        %v961 = vpop.trf.xlu0
        %v962 = vpop.trf.xlu0
        %963 = vxpose.xlu0.b32.start [1/16] %v699, 128
        %964 = vxpose.xlu0.b32.cont [2/16] 0.0, 128
        %965 = vxpose.xlu0.b32.cont [3/16] 0.0, 128
        %966 = vxpose.xlu0.b32.cont [4/16] 0.0, 128
        %967 = vxpose.xlu0.b32.cont [5/16] 0.0, 128
        %968 = vxpose.xlu0.b32.cont [6/16] 0.0, 128
        %969 = vxpose.xlu0.b32.cont [7/16] 0.0, 128
        %970 = vxpose.xlu0.b32.cont [8/16] 0.0, 128
        %971 = vxpose.xlu0.b32.cont [9/16] 0.0, 128
        %972 = vxpose.xlu0.b32.cont [10/16] 0.0, 128
        %973 = vxpose.xlu0.b32.cont [11/16] 0.0, 128
        %974 = vxpose.xlu0.b32.cont [12/16] 0.0, 128
        %975 = vxpose.xlu0.b32.cont [13/16] 0.0, 128
        %976 = vxpose.xlu0.b32.cont [14/16] 0.0, 128
        %977 = vxpose.xlu0.b32.cont [15/16] 0.0, 128
        %978 = vxpose.xlu0.b32.end [16/16] 0.0, 128
        %v979 = vpop.trf.xlu0
        %v980 = vpop.trf.xlu0
        %v981 = vpop.trf.xlu0
        %v982 = vpop.trf.xlu0
        %v983 = vpop.trf.xlu0
        %v984 = vpop.trf.xlu0
        %v985 = vpop.trf.xlu0
        %v986 = vpop.trf.xlu0
        %v987 = vpop.trf.xlu0
        %v988 = vpop.trf.xlu0
        %v989 = vpop.trf.xlu0
        %v990 = vpop.trf.xlu0
        %v991 = vpop.trf.xlu0
        %v992 = vpop.trf.xlu0
        %v993 = vpop.trf.xlu0
        %v994 = vpop.trf.xlu0
        %995 = vxpose.xlu0.b32.start [1/16] %v700, 128
        %996 = vxpose.xlu0.b32.cont [2/16] 0.0, 128
        %997 = vxpose.xlu0.b32.cont [3/16] 0.0, 128
        %998 = vxpose.xlu0.b32.cont [4/16] 0.0, 128
        %999 = vxpose.xlu0.b32.cont [5/16] 0.0, 128
        %1000 = vxpose.xlu0.b32.cont [6/16] 0.0, 128
        %1001 = vxpose.xlu0.b32.cont [7/16] 0.0, 128
        %1002 = vxpose.xlu0.b32.cont [8/16] 0.0, 128
        %1003 = vxpose.xlu0.b32.cont [9/16] 0.0, 128
        %1004 = vxpose.xlu0.b32.cont [10/16] 0.0, 128
        %1005 = vxpose.xlu0.b32.cont [11/16] 0.0, 128
        %1006 = vxpose.xlu0.b32.cont [12/16] 0.0, 128
        %1007 = vxpose.xlu0.b32.cont [13/16] 0.0, 128
        %1008 = vxpose.xlu0.b32.cont [14/16] 0.0, 128
        %1009 = vxpose.xlu0.b32.cont [15/16] 0.0, 128
        %1010 = vxpose.xlu0.b32.end [16/16] 0.0, 128
        %v1011 = vpop.trf.xlu0
        %v1012 = vpop.trf.xlu0
        %v1013 = vpop.trf.xlu0
        %v1014 = vpop.trf.xlu0
        %v1015 = vpop.trf.xlu0
        %v1016 = vpop.trf.xlu0
        %v1017 = vpop.trf.xlu0
        %v1018 = vpop.trf.xlu0
        %v1019 = vpop.trf.xlu0
        %v1020 = vpop.trf.xlu0
        %v1021 = vpop.trf.xlu0
        %v1022 = vpop.trf.xlu0
        %v1023 = vpop.trf.xlu0
        %v1024 = vpop.trf.xlu0
        %v1025 = vpop.trf.xlu0
        %v1026 = vpop.trf.xlu0
        %1027 = vxpose.xlu0.b32.start [1/16] %v701, 128
        %1028 = vxpose.xlu0.b32.cont [2/16] 0.0, 128
        %1029 = vxpose.xlu0.b32.cont [3/16] 0.0, 128
        %1030 = vxpose.xlu0.b32.cont [4/16] 0.0, 128
        %1031 = vxpose.xlu0.b32.cont [5/16] 0.0, 128
        %1032 = vxpose.xlu0.b32.cont [6/16] 0.0, 128
        %1033 = vxpose.xlu0.b32.cont [7/16] 0.0, 128
        %1034 = vxpose.xlu0.b32.cont [8/16] 0.0, 128
        %1035 = vxpose.xlu0.b32.cont [9/16] 0.0, 128
        %1036 = vxpose.xlu0.b32.cont [10/16] 0.0, 128
        %1037 = vxpose.xlu0.b32.cont [11/16] 0.0, 128
        %1038 = vxpose.xlu0.b32.cont [12/16] 0.0, 128
        %1039 = vxpose.xlu0.b32.cont [13/16] 0.0, 128
        %1040 = vxpose.xlu0.b32.cont [14/16] 0.0, 128
        %1041 = vxpose.xlu0.b32.cont [15/16] 0.0, 128
        %1042 = vxpose.xlu0.b32.end [16/16] 0.0, 128
        %v1043 = vpop.trf.xlu0
        %v1044 = vpop.trf.xlu0
        %v1045 = vpop.trf.xlu0
        %v1046 = vpop.trf.xlu0
        %v1047 = vpop.trf.xlu0
        %v1048 = vpop.trf.xlu0
        %v1049 = vpop.trf.xlu0
        %v1050 = vpop.trf.xlu0
        %v1051 = vpop.trf.xlu0
        %v1052 = vpop.trf.xlu0
        %v1053 = vpop.trf.xlu0
        %v1054 = vpop.trf.xlu0
        %v1055 = vpop.trf.xlu0
        %v1056 = vpop.trf.xlu0
        %v1057 = vpop.trf.xlu0
        %v1058 = vpop.trf.xlu0
        %1059 = vxpose.xlu0.b32.start [1/16] %v702, 128
        %1060 = vxpose.xlu0.b32.cont [2/16] 0.0, 128
        %1061 = vxpose.xlu0.b32.cont [3/16] 0.0, 128
        %1062 = vxpose.xlu0.b32.cont [4/16] 0.0, 128
        %1063 = vxpose.xlu0.b32.cont [5/16] 0.0, 128
        %1064 = vxpose.xlu0.b32.cont [6/16] 0.0, 128
        %1065 = vxpose.xlu0.b32.cont [7/16] 0.0, 128
        %1066 = vxpose.xlu0.b32.cont [8/16] 0.0, 128
        %1067 = vxpose.xlu0.b32.cont [9/16] 0.0, 128
        %1068 = vxpose.xlu0.b32.cont [10/16] 0.0, 128
        %1069 = vxpose.xlu0.b32.cont [11/16] 0.0, 128
        %1070 = vxpose.xlu0.b32.cont [12/16] 0.0, 128
        %1071 = vxpose.xlu0.b32.cont [13/16] 0.0, 128
        %1072 = vxpose.xlu0.b32.cont [14/16] 0.0, 128
        %1073 = vxpose.xlu0.b32.cont [15/16] 0.0, 128
        %1074 = vxpose.xlu0.b32.end [16/16] 0.0, 128
        %v1075 = vpop.trf.xlu0
        %v1076 = vpop.trf.xlu0
        %v1077 = vpop.trf.xlu0
        %v1078 = vpop.trf.xlu0
        %v1079 = vpop.trf.xlu0
        %v1080 = vpop.trf.xlu0
        %v1081 = vpop.trf.xlu0
        %v1082 = vpop.trf.xlu0
        %v1083 = vpop.trf.xlu0
        %v1084 = vpop.trf.xlu0
        %v1085 = vpop.trf.xlu0
        %v1086 = vpop.trf.xlu0
        %v1087 = vpop.trf.xlu0
        %v1088 = vpop.trf.xlu0
        %v1089 = vpop.trf.xlu0
        %v1090 = vpop.trf.xlu0
        %1091 = vxpose.xlu0.b32.start [1/16] %v703, 128
        %1092 = vxpose.xlu0.b32.cont [2/16] 0.0, 128
        %1093 = vxpose.xlu0.b32.cont [3/16] 0.0, 128
        %1094 = vxpose.xlu0.b32.cont [4/16] 0.0, 128
        %1095 = vxpose.xlu0.b32.cont [5/16] 0.0, 128
        %1096 = vxpose.xlu0.b32.cont [6/16] 0.0, 128
        %1097 = vxpose.xlu0.b32.cont [7/16] 0.0, 128
        %1098 = vxpose.xlu0.b32.cont [8/16] 0.0, 128
        %1099 = vxpose.xlu0.b32.cont [9/16] 0.0, 128
        %1100 = vxpose.xlu0.b32.cont [10/16] 0.0, 128
        %1101 = vxpose.xlu0.b32.cont [11/16] 0.0, 128
        %1102 = vxpose.xlu0.b32.cont [12/16] 0.0, 128
        %1103 = vxpose.xlu0.b32.cont [13/16] 0.0, 128
        %1104 = vxpose.xlu0.b32.cont [14/16] 0.0, 128
        %1105 = vxpose.xlu0.b32.cont [15/16] 0.0, 128
        %1106 = vxpose.xlu0.b32.end [16/16] 0.0, 128
        %v1107 = vpop.trf.xlu0
        %v1108 = vpop.trf.xlu0
        %v1109 = vpop.trf.xlu0
        %v1110 = vpop.trf.xlu0
        %v1111 = vpop.trf.xlu0
        %v1112 = vpop.trf.xlu0
        %v1113 = vpop.trf.xlu0
        %v1114 = vpop.trf.xlu0
        %v1115 = vpop.trf.xlu0
        %v1116 = vpop.trf.xlu0
        %v1117 = vpop.trf.xlu0
        %v1118 = vpop.trf.xlu0
        %v1119 = vpop.trf.xlu0
        %v1120 = vpop.trf.xlu0
        %v1121 = vpop.trf.xlu0
        %v1122 = vpop.trf.xlu0
        %1123 = vxpose.xlu0.b32.start [1/16] %v704, 128
        %1124 = vxpose.xlu0.b32.cont [2/16] 0.0, 128
        %1125 = vxpose.xlu0.b32.cont [3/16] 0.0, 128
        %1126 = vxpose.xlu0.b32.cont [4/16] 0.0, 128
        %1127 = vxpose.xlu0.b32.cont [5/16] 0.0, 128
        %1128 = vxpose.xlu0.b32.cont [6/16] 0.0, 128
        %1129 = vxpose.xlu0.b32.cont [7/16] 0.0, 128
        %1130 = vxpose.xlu0.b32.cont [8/16] 0.0, 128
        %1131 = vxpose.xlu0.b32.cont [9/16] 0.0, 128
        %1132 = vxpose.xlu0.b32.cont [10/16] 0.0, 128
        %1133 = vxpose.xlu0.b32.cont [11/16] 0.0, 128
        %1134 = vxpose.xlu0.b32.cont [12/16] 0.0, 128
        %1135 = vxpose.xlu0.b32.cont [13/16] 0.0, 128
        %1136 = vxpose.xlu0.b32.cont [14/16] 0.0, 128
        %1137 = vxpose.xlu0.b32.cont [15/16] 0.0, 128
        %1138 = vxpose.xlu0.b32.end [16/16] 0.0, 128
        %v1139 = vpop.trf.xlu0
        %v1140 = vpop.trf.xlu0
        %v1141 = vpop.trf.xlu0
        %v1142 = vpop.trf.xlu0
        %v1143 = vpop.trf.xlu0
        %v1144 = vpop.trf.xlu0
        %v1145 = vpop.trf.xlu0
        %v1146 = vpop.trf.xlu0
        %v1147 = vpop.trf.xlu0
        %v1148 = vpop.trf.xlu0
        %v1149 = vpop.trf.xlu0
        %v1150 = vpop.trf.xlu0
        %v1151 = vpop.trf.xlu0
        %v1152 = vpop.trf.xlu0
        %v1153 = vpop.trf.xlu0
        %v1154 = vpop.trf.xlu0
        %1155 = vxpose.xlu0.b32.start [1/16] %v705, 128
        %1156 = vxpose.xlu0.b32.cont [2/16] 0.0, 128
        %1157 = vxpose.xlu0.b32.cont [3/16] 0.0, 128
        %1158 = vxpose.xlu0.b32.cont [4/16] 0.0, 128
        %1159 = vxpose.xlu0.b32.cont [5/16] 0.0, 128
        %1160 = vxpose.xlu0.b32.cont [6/16] 0.0, 128
        %1161 = vxpose.xlu0.b32.cont [7/16] 0.0, 128
        %1162 = vxpose.xlu0.b32.cont [8/16] 0.0, 128
        %1163 = vxpose.xlu0.b32.cont [9/16] 0.0, 128
        %1164 = vxpose.xlu0.b32.cont [10/16] 0.0, 128
        %1165 = vxpose.xlu0.b32.cont [11/16] 0.0, 128
        %1166 = vxpose.xlu0.b32.cont [12/16] 0.0, 128
        %1167 = vxpose.xlu0.b32.cont [13/16] 0.0, 128
        %1168 = vxpose.xlu0.b32.cont [14/16] 0.0, 128
        %1169 = vxpose.xlu0.b32.cont [15/16] 0.0, 128
        %1170 = vxpose.xlu0.b32.end [16/16] 0.0, 128
        %v1171 = vpop.trf.xlu0
        %v1172 = vpop.trf.xlu0
        %v1173 = vpop.trf.xlu0
        %v1174 = vpop.trf.xlu0
        %v1175 = vpop.trf.xlu0
        %v1176 = vpop.trf.xlu0
        %v1177 = vpop.trf.xlu0
        %v1178 = vpop.trf.xlu0
        %v1179 = vpop.trf.xlu0
        %v1180 = vpop.trf.xlu0
        %v1181 = vpop.trf.xlu0
        %v1182 = vpop.trf.xlu0
        %v1183 = vpop.trf.xlu0
        %v1184 = vpop.trf.xlu0
        %v1185 = vpop.trf.xlu0
        %v1186 = vpop.trf.xlu0
        %1187 = vxpose.xlu0.b32.start [1/16] %v706, 128
        %1188 = vxpose.xlu0.b32.cont [2/16] 0.0, 128
        %1189 = vxpose.xlu0.b32.cont [3/16] 0.0, 128
        %1190 = vxpose.xlu0.b32.cont [4/16] 0.0, 128
        %1191 = vxpose.xlu0.b32.cont [5/16] 0.0, 128
        %1192 = vxpose.xlu0.b32.cont [6/16] 0.0, 128
        %1193 = vxpose.xlu0.b32.cont [7/16] 0.0, 128
        %1194 = vxpose.xlu0.b32.cont [8/16] 0.0, 128
        %1195 = vxpose.xlu0.b32.cont [9/16] 0.0, 128
        %1196 = vxpose.xlu0.b32.cont [10/16] 0.0, 128
        %1197 = vxpose.xlu0.b32.cont [11/16] 0.0, 128
        %1198 = vxpose.xlu0.b32.cont [12/16] 0.0, 128
        %1199 = vxpose.xlu0.b32.cont [13/16] 0.0, 128
        %1200 = vxpose.xlu0.b32.cont [14/16] 0.0, 128
        %1201 = vxpose.xlu0.b32.cont [15/16] 0.0, 128
        %1202 = vxpose.xlu0.b32.end [16/16] 0.0, 128
        %v1203 = vpop.trf.xlu0
        %v1204 = vpop.trf.xlu0
        %v1205 = vpop.trf.xlu0
        %v1206 = vpop.trf.xlu0
        %v1207 = vpop.trf.xlu0
        %v1208 = vpop.trf.xlu0
        %v1209 = vpop.trf.xlu0
        %v1210 = vpop.trf.xlu0
        %v1211 = vpop.trf.xlu0
        %v1212 = vpop.trf.xlu0
        %v1213 = vpop.trf.xlu0
        %v1214 = vpop.trf.xlu0
        %v1215 = vpop.trf.xlu0
        %v1216 = vpop.trf.xlu0
        %v1217 = vpop.trf.xlu0
        %v1218 = vpop.trf.xlu0
        %v1219 = vcombine.low %v723, %v787
        %v1220 = vcombine.high %v723, %v787
        %v1222 = vunpack.c.l.s4 1983009808
        %v1223 = vunpack.c.0.s8 %v1222
        %v1224 = vlaneseq
        %v1225 = vshrl.u32 %v1224, 7
        %v1226 = vsub.s32 %v1223, %v1225
        %v1227 = vrot.slane %v1219, %v1226
        %v1229 = vunpack.c.l.s4 1983009808
        %v1230 = vunpack.c.0.s8 %v1229
        %v1231 = vlaneseq
        %v1232 = vshrl.u32 %v1231, 7
        %v1233 = vsub.s32 %v1230, %v1232
        %v1234 = vrot.slane %v1220, %v1233
        %v1235 = vcombine.low %v755, %v819
        %v1236 = vcombine.high %v755, %v819
        %v1238 = vunpack.c.l.s4 1983009808
        %v1239 = vunpack.c.0.s8 %v1238
        %v1240 = vlaneseq
        %v1241 = vshrl.u32 %v1240, 7
        %v1242 = vsub.s32 %v1239, %v1241
        %v1243 = vrot.slane %v1235, %v1242
        %v1245 = vunpack.c.l.s4 1983009808
        %v1246 = vunpack.c.0.s8 %v1245
        %v1247 = vlaneseq
        %v1248 = vshrl.u32 %v1247, 7
        %v1249 = vsub.s32 %v1246, %v1248
        %v1250 = vrot.slane %v1236, %v1249
        %v1251 = vcombine.low %v851, %v915
        %v1252 = vcombine.high %v851, %v915
        %v1254 = vunpack.c.l.s4 1983009808
        %v1255 = vunpack.c.0.s8 %v1254
        %v1256 = vlaneseq
        %v1257 = vshrl.u32 %v1256, 7
        %v1258 = vsub.s32 %v1255, %v1257
        %v1259 = vrot.slane %v1251, %v1258
        %v1261 = vunpack.c.l.s4 1983009808
        %v1262 = vunpack.c.0.s8 %v1261
        %v1263 = vlaneseq
        %v1264 = vshrl.u32 %v1263, 7
        %v1265 = vsub.s32 %v1262, %v1264
        %v1266 = vrot.slane %v1252, %v1265
        %v1267 = vcombine.low %v883, %v947
        %v1268 = vcombine.high %v883, %v947
        %v1270 = vunpack.c.l.s4 1983009808
        %v1271 = vunpack.c.0.s8 %v1270
        %v1272 = vlaneseq
        %v1273 = vshrl.u32 %v1272, 7
        %v1274 = vsub.s32 %v1271, %v1273
        %v1275 = vrot.slane %v1267, %v1274
        %v1277 = vunpack.c.l.s4 1983009808
        %v1278 = vunpack.c.0.s8 %v1277
        %v1279 = vlaneseq
        %v1280 = vshrl.u32 %v1279, 7
        %v1281 = vsub.s32 %v1278, %v1280
        %v1282 = vrot.slane %v1268, %v1281
        %v1283 = vcombine.low %v1227, %v1243
        %v1284 = vcombine.high %v1227, %v1243
        %v1286 = vunpack.c.l.s4 1934713408
        %v1287 = vunpack.c.0.s8 %v1286
        %v1288 = vlaneseq
        %v1289 = vshrl.u32 %v1288, 7
        %v1290 = vsub.s32 %v1287, %v1289
        %v1291 = vrot.slane %v1283, %v1290
        %v1293 = vunpack.c.l.s4 1934713408
        %v1294 = vunpack.c.0.s8 %v1293
        %v1295 = vlaneseq
        %v1296 = vshrl.u32 %v1295, 7
        %v1297 = vsub.s32 %v1294, %v1296
        %v1298 = vrot.slane %v1284, %v1297
        %v1299 = vcombine.low %v1234, %v1250
        %v1300 = vcombine.high %v1234, %v1250
        %v1302 = vunpack.c.l.s4 1934713408
        %v1303 = vunpack.c.0.s8 %v1302
        %v1304 = vlaneseq
        %v1305 = vshrl.u32 %v1304, 7
        %v1306 = vsub.s32 %v1303, %v1305
        %v1307 = vrot.slane %v1299, %v1306
        %v1309 = vunpack.c.l.s4 1934713408
        %v1310 = vunpack.c.0.s8 %v1309
        %v1311 = vlaneseq
        %v1312 = vshrl.u32 %v1311, 7
        %v1313 = vsub.s32 %v1310, %v1312
        %v1314 = vrot.slane %v1300, %v1313
        %v1315 = vcombine.low %v1259, %v1275
        %v1316 = vcombine.high %v1259, %v1275
        %v1318 = vunpack.c.l.s4 1934713408
        %v1319 = vunpack.c.0.s8 %v1318
        %v1320 = vlaneseq
        %v1321 = vshrl.u32 %v1320, 7
        %v1322 = vsub.s32 %v1319, %v1321
        %v1323 = vrot.slane %v1315, %v1322
        %v1325 = vunpack.c.l.s4 1934713408
        %v1326 = vunpack.c.0.s8 %v1325
        %v1327 = vlaneseq
        %v1328 = vshrl.u32 %v1327, 7
        %v1329 = vsub.s32 %v1326, %v1328
        %v1330 = vrot.slane %v1316, %v1329
        %v1331 = vcombine.low %v1266, %v1282
        %v1332 = vcombine.high %v1266, %v1282
        %v1334 = vunpack.c.l.s4 1934713408
        %v1335 = vunpack.c.0.s8 %v1334
        %v1336 = vlaneseq
        %v1337 = vshrl.u32 %v1336, 7
        %v1338 = vsub.s32 %v1335, %v1337
        %v1339 = vrot.slane %v1331, %v1338
        %v1341 = vunpack.c.l.s4 1934713408
        %v1342 = vunpack.c.0.s8 %v1341
        %v1343 = vlaneseq
        %v1344 = vshrl.u32 %v1343, 7
        %v1345 = vsub.s32 %v1342, %v1344
        %v1346 = vrot.slane %v1332, %v1345
        %v1347 = vcombine.low %v1291, %v1323
        %v1348 = vcombine.high %v1291, %v1323
        %v1349 = vcombine.low %v1298, %v1330
        %v1350 = vcombine.high %v1298, %v1330
        %v1351 = vcombine.low %v1307, %v1339
        %v1352 = vcombine.high %v1307, %v1339
        %v1353 = vcombine.low %v1314, %v1346
        %v1354 = vcombine.high %v1314, %v1346
        %v1355 = vcombine.low %v979, %v1043
        %v1356 = vcombine.high %v979, %v1043
        %v1358 = vunpack.c.l.s4 1983009808
        %v1359 = vunpack.c.0.s8 %v1358
        %v1360 = vlaneseq
        %v1361 = vshrl.u32 %v1360, 7
        %v1362 = vsub.s32 %v1359, %v1361
        %v1363 = vrot.slane %v1355, %v1362
        %v1365 = vunpack.c.l.s4 1983009808
        %v1366 = vunpack.c.0.s8 %v1365
        %v1367 = vlaneseq
        %v1368 = vshrl.u32 %v1367, 7
        %v1369 = vsub.s32 %v1366, %v1368
        %v1370 = vrot.slane %v1356, %v1369
        %v1371 = vcombine.low %v1011, %v1075
        %v1372 = vcombine.high %v1011, %v1075
        %v1374 = vunpack.c.l.s4 1983009808
        %v1375 = vunpack.c.0.s8 %v1374
        %v1376 = vlaneseq
        %v1377 = vshrl.u32 %v1376, 7
        %v1378 = vsub.s32 %v1375, %v1377
        %v1379 = vrot.slane %v1371, %v1378
        %v1381 = vunpack.c.l.s4 1983009808
        %v1382 = vunpack.c.0.s8 %v1381
        %v1383 = vlaneseq
        %v1384 = vshrl.u32 %v1383, 7
        %v1385 = vsub.s32 %v1382, %v1384
        %v1386 = vrot.slane %v1372, %v1385
        %v1387 = vcombine.low %v1107, %v1171
        %v1388 = vcombine.high %v1107, %v1171
        %v1390 = vunpack.c.l.s4 1983009808
        %v1391 = vunpack.c.0.s8 %v1390
        %v1392 = vlaneseq
        %v1393 = vshrl.u32 %v1392, 7
        %v1394 = vsub.s32 %v1391, %v1393
        %v1395 = vrot.slane %v1387, %v1394
        %v1397 = vunpack.c.l.s4 1983009808
        %v1398 = vunpack.c.0.s8 %v1397
        %v1399 = vlaneseq
        %v1400 = vshrl.u32 %v1399, 7
        %v1401 = vsub.s32 %v1398, %v1400
        %v1402 = vrot.slane %v1388, %v1401
        %v1403 = vcombine.low %v1139, %v1203
        %v1404 = vcombine.high %v1139, %v1203
        %v1406 = vunpack.c.l.s4 1983009808
        %v1407 = vunpack.c.0.s8 %v1406
        %v1408 = vlaneseq
        %v1409 = vshrl.u32 %v1408, 7
        %v1410 = vsub.s32 %v1407, %v1409
        %v1411 = vrot.slane %v1403, %v1410
        %v1413 = vunpack.c.l.s4 1983009808
        %v1414 = vunpack.c.0.s8 %v1413
        %v1415 = vlaneseq
        %v1416 = vshrl.u32 %v1415, 7
        %v1417 = vsub.s32 %v1414, %v1416
        %v1418 = vrot.slane %v1404, %v1417
        %v1419 = vcombine.low %v1363, %v1379
        %v1420 = vcombine.high %v1363, %v1379
        %v1422 = vunpack.c.l.s4 1934713408
        %v1423 = vunpack.c.0.s8 %v1422
        %v1424 = vlaneseq
        %v1425 = vshrl.u32 %v1424, 7
        %v1426 = vsub.s32 %v1423, %v1425
        %v1427 = vrot.slane %v1419, %v1426
        %v1429 = vunpack.c.l.s4 1934713408
        %v1430 = vunpack.c.0.s8 %v1429
        %v1431 = vlaneseq
        %v1432 = vshrl.u32 %v1431, 7
        %v1433 = vsub.s32 %v1430, %v1432
        %v1434 = vrot.slane %v1420, %v1433
        %v1435 = vcombine.low %v1370, %v1386
        %v1436 = vcombine.high %v1370, %v1386
        %v1438 = vunpack.c.l.s4 1934713408
        %v1439 = vunpack.c.0.s8 %v1438
        %v1440 = vlaneseq
        %v1441 = vshrl.u32 %v1440, 7
        %v1442 = vsub.s32 %v1439, %v1441
        %v1443 = vrot.slane %v1435, %v1442
        %v1445 = vunpack.c.l.s4 1934713408
        %v1446 = vunpack.c.0.s8 %v1445
        %v1447 = vlaneseq
        %v1448 = vshrl.u32 %v1447, 7
        %v1449 = vsub.s32 %v1446, %v1448
        %v1450 = vrot.slane %v1436, %v1449
        %v1451 = vcombine.low %v1395, %v1411
        %v1452 = vcombine.high %v1395, %v1411
        %v1454 = vunpack.c.l.s4 1934713408
        %v1455 = vunpack.c.0.s8 %v1454
        %v1456 = vlaneseq
        %v1457 = vshrl.u32 %v1456, 7
        %v1458 = vsub.s32 %v1455, %v1457
        %v1459 = vrot.slane %v1451, %v1458
        %v1461 = vunpack.c.l.s4 1934713408
        %v1462 = vunpack.c.0.s8 %v1461
        %v1463 = vlaneseq
        %v1464 = vshrl.u32 %v1463, 7
        %v1465 = vsub.s32 %v1462, %v1464
        %v1466 = vrot.slane %v1452, %v1465
        %v1467 = vcombine.low %v1402, %v1418
        %v1468 = vcombine.high %v1402, %v1418
        %v1470 = vunpack.c.l.s4 1934713408
        %v1471 = vunpack.c.0.s8 %v1470
        %v1472 = vlaneseq
        %v1473 = vshrl.u32 %v1472, 7
        %v1474 = vsub.s32 %v1471, %v1473
        %v1475 = vrot.slane %v1467, %v1474
        %v1477 = vunpack.c.l.s4 1934713408
        %v1478 = vunpack.c.0.s8 %v1477
        %v1479 = vlaneseq
        %v1480 = vshrl.u32 %v1479, 7
        %v1481 = vsub.s32 %v1478, %v1480
        %v1482 = vrot.slane %v1468, %v1481
        %v1483 = vcombine.low %v1427, %v1459
        %v1484 = vcombine.high %v1427, %v1459
        %v1485 = vcombine.low %v1434, %v1466
        %v1486 = vcombine.high %v1434, %v1466
        %v1487 = vcombine.low %v1443, %v1475
        %v1488 = vcombine.high %v1443, %v1475
        %v1489 = vcombine.low %v1450, %v1482
        %v1490 = vcombine.high %v1450, %v1482
        %v1491 = vcombine.low %v724, %v788
        %v1492 = vcombine.high %v724, %v788
        %v1494 = vunpack.c.l.s4 1983009808
        %v1495 = vunpack.c.0.s8 %v1494
        %v1496 = vlaneseq
        %v1497 = vshrl.u32 %v1496, 7
        %v1498 = vsub.s32 %v1495, %v1497
        %v1499 = vrot.slane %v1491, %v1498
        %v1501 = vunpack.c.l.s4 1983009808
        %v1502 = vunpack.c.0.s8 %v1501
        %v1503 = vlaneseq
        %v1504 = vshrl.u32 %v1503, 7
        %v1505 = vsub.s32 %v1502, %v1504
        %v1506 = vrot.slane %v1492, %v1505
        %v1507 = vcombine.low %v756, %v820
        %v1508 = vcombine.high %v756, %v820
        %v1510 = vunpack.c.l.s4 1983009808
        %v1511 = vunpack.c.0.s8 %v1510
        %v1512 = vlaneseq
        %v1513 = vshrl.u32 %v1512, 7
        %v1514 = vsub.s32 %v1511, %v1513
        %v1515 = vrot.slane %v1507, %v1514
        %v1517 = vunpack.c.l.s4 1983009808
        %v1518 = vunpack.c.0.s8 %v1517
        %v1519 = vlaneseq
        %v1520 = vshrl.u32 %v1519, 7
        %v1521 = vsub.s32 %v1518, %v1520
        %v1522 = vrot.slane %v1508, %v1521
        %v1523 = vcombine.low %v852, %v916
        %v1524 = vcombine.high %v852, %v916
        %v1526 = vunpack.c.l.s4 1983009808
        %v1527 = vunpack.c.0.s8 %v1526
        %v1528 = vlaneseq
        %v1529 = vshrl.u32 %v1528, 7
        %v1530 = vsub.s32 %v1527, %v1529
        %v1531 = vrot.slane %v1523, %v1530
        %v1533 = vunpack.c.l.s4 1983009808
        %v1534 = vunpack.c.0.s8 %v1533
        %v1535 = vlaneseq
        %v1536 = vshrl.u32 %v1535, 7
        %v1537 = vsub.s32 %v1534, %v1536
        %v1538 = vrot.slane %v1524, %v1537
        %v1539 = vcombine.low %v884, %v948
        %v1540 = vcombine.high %v884, %v948
        %v1542 = vunpack.c.l.s4 1983009808
        %v1543 = vunpack.c.0.s8 %v1542
        %v1544 = vlaneseq
        %v1545 = vshrl.u32 %v1544, 7
        %v1546 = vsub.s32 %v1543, %v1545
        %v1547 = vrot.slane %v1539, %v1546
        %v1549 = vunpack.c.l.s4 1983009808
        %v1550 = vunpack.c.0.s8 %v1549
        %v1551 = vlaneseq
        %v1552 = vshrl.u32 %v1551, 7
        %v1553 = vsub.s32 %v1550, %v1552
        %v1554 = vrot.slane %v1540, %v1553
        %v1555 = vcombine.low %v1499, %v1515
        %v1556 = vcombine.high %v1499, %v1515
        %v1558 = vunpack.c.l.s4 1934713408
        %v1559 = vunpack.c.0.s8 %v1558
        %v1560 = vlaneseq
        %v1561 = vshrl.u32 %v1560, 7
        %v1562 = vsub.s32 %v1559, %v1561
        %v1563 = vrot.slane %v1555, %v1562
        %v1565 = vunpack.c.l.s4 1934713408
        %v1566 = vunpack.c.0.s8 %v1565
        %v1567 = vlaneseq
        %v1568 = vshrl.u32 %v1567, 7
        %v1569 = vsub.s32 %v1566, %v1568
        %v1570 = vrot.slane %v1556, %v1569
        %v1571 = vcombine.low %v1506, %v1522
        %v1572 = vcombine.high %v1506, %v1522
        %v1574 = vunpack.c.l.s4 1934713408
        %v1575 = vunpack.c.0.s8 %v1574
        %v1576 = vlaneseq
        %v1577 = vshrl.u32 %v1576, 7
        %v1578 = vsub.s32 %v1575, %v1577
        %v1579 = vrot.slane %v1571, %v1578
        %v1581 = vunpack.c.l.s4 1934713408
        %v1582 = vunpack.c.0.s8 %v1581
        %v1583 = vlaneseq
        %v1584 = vshrl.u32 %v1583, 7
        %v1585 = vsub.s32 %v1582, %v1584
        %v1586 = vrot.slane %v1572, %v1585
        %v1587 = vcombine.low %v1531, %v1547
        %v1588 = vcombine.high %v1531, %v1547
        %v1590 = vunpack.c.l.s4 1934713408
        %v1591 = vunpack.c.0.s8 %v1590
        %v1592 = vlaneseq
        %v1593 = vshrl.u32 %v1592, 7
        %v1594 = vsub.s32 %v1591, %v1593
        %v1595 = vrot.slane %v1587, %v1594
        %v1597 = vunpack.c.l.s4 1934713408
        %v1598 = vunpack.c.0.s8 %v1597
        %v1599 = vlaneseq
        %v1600 = vshrl.u32 %v1599, 7
        %v1601 = vsub.s32 %v1598, %v1600
        %v1602 = vrot.slane %v1588, %v1601
        %v1603 = vcombine.low %v1538, %v1554
        %v1604 = vcombine.high %v1538, %v1554
        %v1606 = vunpack.c.l.s4 1934713408
        %v1607 = vunpack.c.0.s8 %v1606
        %v1608 = vlaneseq
        %v1609 = vshrl.u32 %v1608, 7
        %v1610 = vsub.s32 %v1607, %v1609
        %v1611 = vrot.slane %v1603, %v1610
        %v1613 = vunpack.c.l.s4 1934713408
        %v1614 = vunpack.c.0.s8 %v1613
        %v1615 = vlaneseq
        %v1616 = vshrl.u32 %v1615, 7
        %v1617 = vsub.s32 %v1614, %v1616
        %v1618 = vrot.slane %v1604, %v1617
        %v1619 = vcombine.low %v1563, %v1595
        %v1620 = vcombine.high %v1563, %v1595
        %v1621 = vcombine.low %v1570, %v1602
        %v1622 = vcombine.high %v1570, %v1602
        %v1623 = vcombine.low %v1579, %v1611
        %v1624 = vcombine.high %v1579, %v1611
        %v1625 = vcombine.low %v1586, %v1618
        %v1626 = vcombine.high %v1586, %v1618
        %v1627 = vcombine.low %v980, %v1044
        %v1628 = vcombine.high %v980, %v1044
        %v1630 = vunpack.c.l.s4 1983009808
        %v1631 = vunpack.c.0.s8 %v1630
        %v1632 = vlaneseq
        %v1633 = vshrl.u32 %v1632, 7
        %v1634 = vsub.s32 %v1631, %v1633
        %v1635 = vrot.slane %v1627, %v1634
        %v1637 = vunpack.c.l.s4 1983009808
        %v1638 = vunpack.c.0.s8 %v1637
        %v1639 = vlaneseq
        %v1640 = vshrl.u32 %v1639, 7
        %v1641 = vsub.s32 %v1638, %v1640
        %v1642 = vrot.slane %v1628, %v1641
        %v1643 = vcombine.low %v1012, %v1076
        %v1644 = vcombine.high %v1012, %v1076
        %v1646 = vunpack.c.l.s4 1983009808
        %v1647 = vunpack.c.0.s8 %v1646
        %v1648 = vlaneseq
        %v1649 = vshrl.u32 %v1648, 7
        %v1650 = vsub.s32 %v1647, %v1649
        %v1651 = vrot.slane %v1643, %v1650
        %v1653 = vunpack.c.l.s4 1983009808
        %v1654 = vunpack.c.0.s8 %v1653
        %v1655 = vlaneseq
        %v1656 = vshrl.u32 %v1655, 7
        %v1657 = vsub.s32 %v1654, %v1656
        %v1658 = vrot.slane %v1644, %v1657
        %v1659 = vcombine.low %v1108, %v1172
        %v1660 = vcombine.high %v1108, %v1172
        %v1662 = vunpack.c.l.s4 1983009808
        %v1663 = vunpack.c.0.s8 %v1662
        %v1664 = vlaneseq
        %v1665 = vshrl.u32 %v1664, 7
        %v1666 = vsub.s32 %v1663, %v1665
        %v1667 = vrot.slane %v1659, %v1666
        %v1669 = vunpack.c.l.s4 1983009808
        %v1670 = vunpack.c.0.s8 %v1669
        %v1671 = vlaneseq
        %v1672 = vshrl.u32 %v1671, 7
        %v1673 = vsub.s32 %v1670, %v1672
        %v1674 = vrot.slane %v1660, %v1673
        %v1675 = vcombine.low %v1140, %v1204
        %v1676 = vcombine.high %v1140, %v1204
        %v1678 = vunpack.c.l.s4 1983009808
        %v1679 = vunpack.c.0.s8 %v1678
        %v1680 = vlaneseq
        %v1681 = vshrl.u32 %v1680, 7
        %v1682 = vsub.s32 %v1679, %v1681
        %v1683 = vrot.slane %v1675, %v1682
        %v1685 = vunpack.c.l.s4 1983009808
        %v1686 = vunpack.c.0.s8 %v1685
        %v1687 = vlaneseq
        %v1688 = vshrl.u32 %v1687, 7
        %v1689 = vsub.s32 %v1686, %v1688
        %v1690 = vrot.slane %v1676, %v1689
        %v1691 = vcombine.low %v1635, %v1651
        %v1692 = vcombine.high %v1635, %v1651
        %v1694 = vunpack.c.l.s4 1934713408
        %v1695 = vunpack.c.0.s8 %v1694
        %v1696 = vlaneseq
        %v1697 = vshrl.u32 %v1696, 7
        %v1698 = vsub.s32 %v1695, %v1697
        %v1699 = vrot.slane %v1691, %v1698
        %v1701 = vunpack.c.l.s4 1934713408
        %v1702 = vunpack.c.0.s8 %v1701
        %v1703 = vlaneseq
        %v1704 = vshrl.u32 %v1703, 7
        %v1705 = vsub.s32 %v1702, %v1704
        %v1706 = vrot.slane %v1692, %v1705
        %v1707 = vcombine.low %v1642, %v1658
        %v1708 = vcombine.high %v1642, %v1658
        %v1710 = vunpack.c.l.s4 1934713408
        %v1711 = vunpack.c.0.s8 %v1710
        %v1712 = vlaneseq
        %v1713 = vshrl.u32 %v1712, 7
        %v1714 = vsub.s32 %v1711, %v1713
        %v1715 = vrot.slane %v1707, %v1714
        %v1717 = vunpack.c.l.s4 1934713408
        %v1718 = vunpack.c.0.s8 %v1717
        %v1719 = vlaneseq
        %v1720 = vshrl.u32 %v1719, 7
        %v1721 = vsub.s32 %v1718, %v1720
        %v1722 = vrot.slane %v1708, %v1721
        %v1723 = vcombine.low %v1667, %v1683
        %v1724 = vcombine.high %v1667, %v1683
        %v1726 = vunpack.c.l.s4 1934713408
        %v1727 = vunpack.c.0.s8 %v1726
        %v1728 = vlaneseq
        %v1729 = vshrl.u32 %v1728, 7
        %v1730 = vsub.s32 %v1727, %v1729
        %v1731 = vrot.slane %v1723, %v1730
        %v1733 = vunpack.c.l.s4 1934713408
        %v1734 = vunpack.c.0.s8 %v1733
        %v1735 = vlaneseq
        %v1736 = vshrl.u32 %v1735, 7
        %v1737 = vsub.s32 %v1734, %v1736
        %v1738 = vrot.slane %v1724, %v1737
        %v1739 = vcombine.low %v1674, %v1690
        %v1740 = vcombine.high %v1674, %v1690
        %v1742 = vunpack.c.l.s4 1934713408
        %v1743 = vunpack.c.0.s8 %v1742
        %v1744 = vlaneseq
        %v1745 = vshrl.u32 %v1744, 7
        %v1746 = vsub.s32 %v1743, %v1745
        %v1747 = vrot.slane %v1739, %v1746
        %v1749 = vunpack.c.l.s4 1934713408
        %v1750 = vunpack.c.0.s8 %v1749
        %v1751 = vlaneseq
        %v1752 = vshrl.u32 %v1751, 7
        %v1753 = vsub.s32 %v1750, %v1752
        %v1754 = vrot.slane %v1740, %v1753
        %v1755 = vcombine.low %v1699, %v1731
        %v1756 = vcombine.high %v1699, %v1731
        %v1757 = vcombine.low %v1706, %v1738
        %v1758 = vcombine.high %v1706, %v1738
        %v1759 = vcombine.low %v1715, %v1747
        %v1760 = vcombine.high %v1715, %v1747
        %v1761 = vcombine.low %v1722, %v1754
        %v1762 = vcombine.high %v1722, %v1754
        %vm1763 = vcmask 64512
        %1764 = vst.msk [vmem:[%s162] sm:$0xff] %vm1763, %v1347
        %1765 = vst.msk [vmem:[%s162 + $0x8] sm:$0xff] %vm1763, %v1483
        %1766 = vst.msk [vmem:[%s162 + $0x10] sm:$0xff] %vm1763, %v1348
        %1767 = vst.msk [vmem:[%s162 + $0x18] sm:$0xff] %vm1763, %v1484
        %1768 = vst.msk [vmem:[%s162 + $0x20] sm:$0xff] %vm1763, %v1349
        %1769 = vst.msk [vmem:[%s162 + $0x28] sm:$0xff] %vm1763, %v1485
        %1770 = vst.msk [vmem:[%s162 + $0x30] sm:$0xff] %vm1763, %v1350
        %1771 = vst.msk [vmem:[%s162 + $0x38] sm:$0xff] %vm1763, %v1486
        %1772 = vst.msk [vmem:[%s162 + $0x40] sm:$0xff] %vm1763, %v1351
        %1773 = vst.msk [vmem:[%s162 + $0x48] sm:$0xff] %vm1763, %v1487
        %1774 = vst.msk [vmem:[%s162 + $0x50] sm:$0xff] %vm1763, %v1352
        %1775 = vst.msk [vmem:[%s162 + $0x58] sm:$0xff] %vm1763, %v1488
        %1776 = vst.msk [vmem:[%s162 + $0x60] sm:$0xff] %vm1763, %v1353
        %1777 = vst.msk [vmem:[%s162 + $0x68] sm:$0xff] %vm1763, %v1489
        %1778 = vst.msk [vmem:[%s162 + $0x70] sm:$0xff] %vm1763, %v1354
        %1779 = vst.msk [vmem:[%s162 + $0x78] sm:$0xff] %vm1763, %v1490
        %1780 = vst.msk [vmem:[%s162 + $0x80] sm:$0xff] %vm1763, %v1619
        %1781 = vst.msk [vmem:[%s162 + $0x88] sm:$0xff] %vm1763, %v1755
        %1782 = vst.msk [vmem:[%s162 + $0x90] sm:$0xff] %vm1763, %v1620
        %1783 = vst.msk [vmem:[%s162 + $0x98] sm:$0xff] %vm1763, %v1756
        %1784 = vst.msk [vmem:[%s162 + $0xa0] sm:$0xff] %vm1763, %v1621
        %1785 = vst.msk [vmem:[%s162 + $0xa8] sm:$0xff] %vm1763, %v1757
        %1786 = vst.msk [vmem:[%s162 + $0xb0] sm:$0xff] %vm1763, %v1622
        %1787 = vst.msk [vmem:[%s162 + $0xb8] sm:$0xff] %vm1763, %v1758
        %1788 = vst.msk [vmem:[%s162 + $0xc0] sm:$0xff] %vm1763, %v1623
        %1789 = vst.msk [vmem:[%s162 + $0xc8] sm:$0xff] %vm1763, %v1759
        %1790 = vst.msk [vmem:[%s162 + $0xd0] sm:$0xff] %vm1763, %v1624
        %1791 = vst.msk [vmem:[%s162 + $0xd8] sm:$0xff] %vm1763, %v1760
        %1792 = vst.msk [vmem:[%s162 + $0xe0] sm:$0xff] %vm1763, %v1625
        %1793 = vst.msk [vmem:[%s162 + $0xe8] sm:$0xff] %vm1763, %v1761
        %1794 = vst.msk [vmem:[%s162 + $0xf0] sm:$0xff] %vm1763, %v1626
        %1795 = vst.msk [vmem:[%s162 + $0xf8] sm:$0xff] %vm1763, %v1762
        %p1796 = scmp.lt.s32.totalorder %s19, 1
        %s1797 = scalar_select %p1796, %s19, 1
        %p1798 = scmp.lt.s32.totalorder %s20, 2
        %s1799 = scalar_select %p1798, %s20, 2
        %s1800 = smul.addr %s1799, 32
        %s1801 = smul.addr %s1797, 96
        %s1802 = sadd.s32 %s1800, %s1801
        %s1803 = smul.addr %s1802, 8
        %s1804 = scalar_lea.vmem %s1, %s1803
        // Predicated region
        $region29: #{tpu_custom_call.1} parent=23 // pred_check
          %p1805 = pneg %p75
        $region30: #{tpu_custom_call.1} parent=23 // pred_check_branch
          %1807 = sbr.rel (%p1805) target = $region32
        $region31: #{tpu_custom_call.1} parent=23 // pred_region
          _
        $region32: #{tpu_custom_call.1} parent=23 // pred_fallthru
          _
      $region24: #{tpu_custom_call.1} parent=5 // pred_fallthru
        _
      %p1808 = scmp.le.s32.totalorder 2, %s10
      // Predicated region
      $region33: #{tpu_custom_call.1} parent=5 // pred_check
        %p1809 = pneg %p1808
      $region34: #{tpu_custom_call.1} parent=5 // pred_check_branch
        %1811 = sbr.rel (%p1809) target = $region36
      $region35: #{tpu_custom_call.1} parent=5 // pred_region
        %s1812 = ssub.s32 %s10, 2
        // Predicated region
        $region37: #{tpu_custom_call.1} parent=35 // pred_check
          %p1813 = pneg %p81
        $region38: #{tpu_custom_call.1} parent=35 // pred_check_branch
          %1815 = sbr.rel (%p1813) target = $region40
        $region39: #{tpu_custom_call.1} parent=35 // pred_region
          %p1816 = scmp.lt.s32.totalorder %s21, 1
          %s1817 = scalar_select %p1816, %s21, 1
          %p1818 = scmp.lt.s32.totalorder %s22, 2
          %s1819 = scalar_select %p1818, %s22, 2
          %s1820 = smul.addr %s1819, 32
          %s1821 = smul.addr %s1817, 96
          %s1822 = sadd.s32 %s1820, %s1821
          %s1823 = smul.addr %s1822, 8
          %s1824 = scalar_lea.vmem %s1, %s1823
        $region40: #{tpu_custom_call.1} parent=35 // pred_fallthru
          _
      $region36: #{tpu_custom_call.1} parent=5 // pred_fallthru
        _
    $region6: #{tpu_custom_call.1} parent=1 // loop_footer
      %s14 = sadd.s32 1, %s10
    $region7: #{tpu_custom_call.1} parent=1 // loop_footer_branch
      %9 = sbr.rel target = $region3
    $region8: #{tpu_custom_call.1} parent=1 // loop_exit
      _
    %1825 = vsyncpa [#allocation3], 1
    %s1826 = scalar_lea.sflag [#allocation3], 1
    %1827 = vsyncpa %s1826, 1

</llo_original>
